<compile_context>
chip_gen: v7x
topology: tpu7x:2x2x1
jax: 0.10.0
libtpu: 0.0.40
codegen_flags: <defaults>
</compile_context>

<pallas_src>
import functools

import jax
import jax.numpy as jnp
import numpy as np
from jax import lax
from jax.experimental import pallas as pl
from jax.experimental.pallas import tpu as pltpu


def _round_up(x, m):
    return (x + m - 1) // m * m


def _attn_kernel(k, groups, n, c_out, Wp, marg, WPAD,
                 x_ref, w_ref,            # VMEM inputs
                 y_ref,                   # VMEM output (c_out, WPAD)
                 all_ref, att_ref):       # VMEM scratch
    """One batch element per grid step.

    x_ref  : (c_in, WB)   reflect-padded input, spatial flattened to lanes,
                          zero margin of width `marg` on the left, zeros to WB.
    w_ref  : (R, c_in)    stacked block-diagonal grouped-conv weights in
                          o-major row order (row = o*groups + g):
                          rows [0,C)=key, [C,2C)=value, [2C,3C)=query,
                          [3C,3C+k2*groups)=positional bias (r_mat @ wq).
    y_ref  : (c_out, WPAD) output on the padded-flat domain; lanes [0, Hp*Wp)
                          valid, wrapper crops.
    """
    k2 = k * k
    f32 = jnp.float32
    ROW_K, ROW_V, ROW_Q, ROW_B = 0, c_out, 2 * c_out, 3 * c_out

    # -- single stacked MXU matmul: key / value / query / bias-logits at once.
    all_ref[...] = jnp.dot(w_ref[...], x_ref[...], preferred_element_type=f32)

    # query on the output lane domain (output lane l == padded-flat position l)
    q = all_ref[ROW_Q:ROW_Q + c_out, marg:marg + WPAD]            # (c_out, WPAD)

    # -- pass 1: logits per window offset -> att scratch, track running max.
    m = None
    for p in range(k2):
        di, dj = divmod(p, k)
        start = di * Wp + dj                       # static lane shift of window p
        kwin = all_ref[ROW_K:ROW_K + c_out, start:start + WPAD]   # (c_out, WPAD)
        lg = all_ref[ROW_B + p * groups:ROW_B + (p + 1) * groups,
                     marg:marg + WPAD]             # bias term, (groups, WPAD)
        for o in range(n):
            rows = slice(o * groups, (o + 1) * groups)   # 8-sublane aligned
            lg = lg + q[rows, :] * kwin[rows, :]
        att_ref[p * groups:(p + 1) * groups, :] = lg
        m = lg if p == 0 else jnp.maximum(m, lg)

    # -- pass 2 (fused): exp + running sum + value accumulation in one sweep.
    ssum = jnp.zeros((groups, WPAD), f32)
    acc = [jnp.zeros((groups, WPAD), f32) for _ in range(n)]
    for p in range(k2):
        di, dj = divmod(p, k)
        start = di * Wp + dj
        e = jnp.exp(att_ref[p * groups:(p + 1) * groups, :] - m)
        ssum = ssum + e
        vwin = all_ref[ROW_V:ROW_V + c_out, start:start + WPAD]
        for o in range(n):
            rows = slice(o * groups, (o + 1) * groups)
            acc[o] = acc[o] + e * vwin[rows, :]

    inv = pl.reciprocal(ssum, approx=False)        # exact, keeps tight tolerance
    for o in range(n):
        y_ref[o * groups:(o + 1) * groups, :] = (acc[o] * inv).astype(y_ref.dtype)


def self_attention_block(x, wk, wq, wv, r_ai, r_aj, *, groups, k):
    # TODO(synk): only stride=1 is supported (the module's .view(b,g,n,h,w,-1)
    # is only valid for stride=1 anyway).
    b, c_in, h, w = x.shape
    c_out = wk.shape[0]
    n = c_out // groups
    cin_g = c_in // groups
    pad = k // 2
    Hp, Wp = h + 2 * pad, w + 2 * pad
    P2 = Hp * Wp
    k2 = k * k
    marg = pad * Wp + pad                      # max |window shift| on the flat axis
    WPAD = _round_up(P2, 128)                  # lane-aligned output / logit width
    WB = _round_up(WPAD + 2 * marg, 128)       # lane-aligned key/value buffer width

    # channel permutation: row rho = o*groups + g  <->  original channel c = g*n + o
    rho = np.arange(c_out)
    c_of_rho = (rho % groups) * n + rho // groups                       # row -> orig chan
    rho_of_c = (np.arange(c_out) % n) * groups + np.arange(c_out) // n  # orig chan -> row

    # ---- glue: reflect pad, flatten spatial to lanes, add zero margins -----
    # TODO(synk): at production feature-map sizes fold this into the kernel DMA
    # (halo index_map / manual copies) instead of an extra HBM round trip.
    xpad = jnp.pad(x, ((0, 0), (0, 0), (pad, pad), (pad, pad)), mode="reflect")
    x_flat = xpad.reshape(b, c_in, P2).astype(jnp.float32)
    x_buf = jnp.pad(x_flat, ((0, 0), (0, 0), (marg, WB - P2 - marg)))

    # ---- glue: block-diagonal grouped-conv weights, rows in o-major order --
    # TODO(synk): for c_in > 128 switch to per-group (n, cin_g) matmuls instead
    # of the groups-times-denser block-diagonal form.
    onehot_g = jnp.eye(groups, dtype=jnp.float32)[np.arange(c_out) % groups]  # (c_out, groups)

    def bd_weights(wgt):
        w2 = wgt.reshape(c_out, cin_g).astype(jnp.float32)[c_of_rho]          # (c_out, cin_g)
        return jnp.einsum("rc,rg->rgc", w2, onehot_g).reshape(c_out, c_in)

    wk_bd = bd_weights(wk)
    wq_bd = bd_weights(wq)
    wv_bd = bd_weights(wv)

    # ---- glue: positional-bias matrix folded onto the query weights --------
    r_full = jnp.concatenate(
        [jnp.broadcast_to(r_ai[0], (c_out // 2, k, k)),
         jnp.broadcast_to(r_aj[0], (c_out // 2, k, k))], axis=0)
    r_flat = r_full.reshape(c_out, k2).astype(jnp.float32)[c_of_rho]          # (c_out, k2)
    r_mat = jnp.einsum("rp,rg->pgr", r_flat, onehot_g).reshape(k2 * groups, c_out)
    rq_bd = jnp.dot(r_mat, wq_bd, precision=lax.Precision.HIGHEST)            # (k2*groups, c_in)

    # ---- stacked weights: key | value | query | bias -> one MXU matmul -----
    w_all = jnp.concatenate([wk_bd, wv_bd, wq_bd, rq_bd], axis=0)
    R = 3 * c_out + k2 * groups
    R_pad = _round_up(R, 8)
    if R_pad != R:
        w_all = jnp.pad(w_all, ((0, R_pad - R), (0, 0)))

    kernel = functools.partial(_attn_kernel, k, groups, n, c_out, Wp, marg, WPAD)

    # TODO(synk): add a 'parallel' spatial-tile grid axis (halo'd lane chunks)
    # for large feature maps so v7x's 64 MiB VMEM is respected and both of its
    # TensorCores get >=2 steps; unnecessary at these toy shapes.
    y_perm = pl.pallas_call(
        kernel,
        grid=(b,),
        in_specs=[
            pl.BlockSpec((None, c_in, WB), lambda bi: (bi, 0, 0)),
            pl.BlockSpec((R_pad, c_in), lambda bi: (0, 0)),
        ],
        out_specs=pl.BlockSpec((None, c_out, WPAD), lambda bi: (bi, 0, 0)),
        out_shape=jax.ShapeDtypeStruct((b, c_out, WPAD), jnp.float32),
        scratch_shapes=[
            pltpu.VMEM((R_pad, WB), jnp.float32),          # key/value/query/bias slab
            pltpu.VMEM((k2 * groups, WPAD), jnp.float32),  # logits
        ],
        compiler_params=pltpu.CompilerParams(
            dimension_semantics=("parallel",)),
    )(x_buf, w_all)

    # ---- glue: un-permute channels, crop the centre of the padded domain ---
    y_pad = y_perm[:, rho_of_c, :P2].reshape(b, c_out, Hp, Wp)
    return y_pad[:, :, pad:pad + h, pad:pad + w]


def reference(x, wk, wq, wv, r_ai, r_aj, *, groups, k):
    """Pure-JAX reproduction of the PyTorch forward for verification."""
    b, c_in, h, w = x.shape
    c_out = wk.shape[0]
    n = c_out // groups
    cin_g = c_in // groups
    pad = k // 2
    xp = jnp.pad(x, ((0, 0), (0, 0), (pad, pad), (pad, pad)), mode="reflect")

    def gconv(inp, wgt):
        bsz, _, hh, ww = inp.shape
        inp_g = inp.reshape(bsz, groups, cin_g, hh, ww)
        wgt_g = wgt.reshape(groups, n, cin_g)
        return jnp.einsum("gnc,bgcuv->bgnuv", wgt_g, inp_g).reshape(bsz, c_out, hh, ww)

    key = gconv(xp, wk)
    val = gconv(xp, wv)
    q = gconv(x, wq)

    def unfold(t):
        return jnp.stack(
            [jnp.stack([t[:, :, di:di + h, dj:dj + w] for dj in range(k)], axis=-1)
             for di in range(k)], axis=-2)

    ku = unfold(key).reshape(b, groups, n, h, w, k * k)
    vu = unfold(val).reshape(b, groups, n, h, w, k * k)
    r_full = jnp.concatenate(
        [jnp.broadcast_to(r_ai[0], (c_out // 2, k, k)),
         jnp.broadcast_to(r_aj[0], (c_out // 2, k, k))], axis=0
    ).reshape(groups, n, k * k)
    out = ku + r_full[None, :, :, None, None, :]
    out = q.reshape(b, groups, n, h, w, 1) * out
    attn = jax.nn.softmax(out.sum(2, keepdims=True), axis=-1)
    return (attn * vu).sum(-1).reshape(b, c_out, h, w)


if __name__ == "__main__":
    b, c_in, c_out, groups, ksz, h, w = 2, 16, 16, 8, 3, 16, 16
    cin_g = c_in // groups

    rng = jax.random.PRNGKey(0)
    k0, k1, k2_, k3, k4, k5 = jax.random.split(rng, 6)
    x = jax.random.normal(k0, (b, c_in, h, w), jnp.float32)
    wk = jax.random.normal(k1, (c_out, cin_g, 1, 1), jnp.float32) * 0.5
    wq = jax.random.normal(k2_, (c_out, cin_g, 1, 1), jnp.float32) * 0.5
    wv = jax.random.normal(k3, (c_out, cin_g, 1, 1), jnp.float32) * 0.5
    r_ai = jax.random.normal(k4, (1, c_out // 2, ksz, 1), jnp.float32)
    r_aj = jax.random.normal(k5, (1, c_out // 2, 1, ksz), jnp.float32)

    y = self_attention_block(x, wk, wq, wv, r_ai, r_aj, groups=groups, k=ksz)
    y = jax.block_until_ready(y)

    y_ref = reference(x, wk, wq, wv, r_ai, r_aj, groups=groups, k=ksz)
    assert y.shape == (b, c_out, h, w)
    np.testing.assert_allclose(np.asarray(y), np.asarray(y_ref), rtol=2e-2, atol=2e-2)
    print("KERNEL_OK")
</pallas_src>

<mosaic_0001>
module attributes {stable_mosaic.version = 11 : i64} {
  func.func @_attn_kernel(%arg0: i32, %arg1: memref<1x16x512xf32, #tpu.memory_space<vmem>>, %arg2: memref<120x16xf32, #tpu.memory_space<vmem>>, %arg3: memref<1x16x384xf32, #tpu.memory_space<vmem>>, %arg4: memref<120x512xf32, #tpu.memory_space<vmem>>, %arg5: memref<72x384xf32, #tpu.memory_space<vmem>>) attributes {dimension_semantics = [#tpu.dimension_semantics<parallel>], iteration_bounds = array<i64: 2>, scalar_prefetch = 0 : i64, scratch_operands = 2 : i64, tpu.core_type = #tpu.core_type<tc>, window_params = [{transform_indices = @transform_0, window_bounds = array<i64: 1, 16, 512>}, {pipeline_mode = #tpu.pipeline_mode<synchronous>, transform_indices = @transform_1, window_bounds = array<i64: 120, 16>}, {transform_indices = @transform_2, window_bounds = array<i64: 1, 16, 384>}]} {
    %c0 = arith.constant 0 : index
    %c0_0 = arith.constant 0 : index
    %0 = vector.load %arg2[%c0, %c0_0] : memref<120x16xf32, #tpu.memory_space<vmem>>, vector<120x16xf32>
    %c0_1 = arith.constant 0 : index
    %c0_2 = arith.constant 0 : index
    %c0_3 = arith.constant 0 : index
    %1 = vector.load %arg1[%c0_1, %c0_2, %c0_3] : memref<1x16x512xf32, #tpu.memory_space<vmem>>, vector<1x16x512xf32>
    %2 = vector.shape_cast %1 : vector<1x16x512xf32> to vector<16x512xf32>
    %cst = arith.constant dense<0.000000e+00> : vector<120x512xf32>
    %3 = tpu.matmul %0, %2, %cst {dimension_numbers = #tpu.dot_dimension_numbers<[1], [0], [0], [1], [0, 0, 1, 1], [], []>} : vector<120x16xf32>, vector<16x512xf32>, vector<120x512xf32> -> vector<120x512xf32>
    %c0_4 = arith.constant 0 : index
    %c0_5 = arith.constant 0 : index
    %4 = vector.load %arg4[%c0_4, %c0_5] : memref<120x512xf32, #tpu.memory_space<vmem>>, vector<120x512xf32>
    tpu.vector_store %arg4[%c0_4, %c0_5], %3 {strides = array<i32>} : memref<120x512xf32, #tpu.memory_space<vmem>>, vector<120x512xf32>,
    %c32 = arith.constant 32 : index
    %c19 = arith.constant 19 : index
    %5 = vector.load %arg4[%c32, %c19] : memref<120x512xf32, #tpu.memory_space<vmem>>, vector<16x384xf32>
    %c0_6 = arith.constant 0 : index
    %c0_7 = arith.constant 0 : index
    %6 = vector.load %arg4[%c0_6, %c0_7] : memref<120x512xf32, #tpu.memory_space<vmem>>, vector<16x384xf32>
    %c48 = arith.constant 48 : index
    %c19_8 = arith.constant 19 : index
    %7 = vector.load %arg4[%c48, %c19_8] : memref<120x512xf32, #tpu.memory_space<vmem>>, vector<8x384xf32>
    %8 = vector.extract_strided_slice %5 {offsets = [0, 0], sizes = [8, 384], strides = [1, 1]} : vector<16x384xf32> to vector<8x384xf32>
    %9 = vector.extract_strided_slice %6 {offsets = [0, 0], sizes = [8, 384], strides = [1, 1]} : vector<16x384xf32> to vector<8x384xf32>
    %10 = arith.mulf %8, %9 : vector<8x384xf32>
    %11 = arith.addf %7, %10 : vector<8x384xf32>
    %12 = vector.extract_strided_slice %5 {offsets = [8, 0], sizes = [8, 384], strides = [1, 1]} : vector<16x384xf32> to vector<8x384xf32>
    %13 = vector.extract_strided_slice %6 {offsets = [8, 0], sizes = [8, 384], strides = [1, 1]} : vector<16x384xf32> to vector<8x384xf32>
    %14 = arith.mulf %12, %13 : vector<8x384xf32>
    %15 = arith.addf %11, %14 : vector<8x384xf32>
    %c0_9 = arith.constant 0 : index
    %c0_10 = arith.constant 0 : index
    %16 = vector.load %arg5[%c0_9, %c0_10] : memref<72x384xf32, #tpu.memory_space<vmem>>, vector<8x384xf32>
    tpu.vector_store %arg5[%c0_9, %c0_10], %15 {strides = array<i32>} : memref<72x384xf32, #tpu.memory_space<vmem>>, vector<8x384xf32>,
    %c0_11 = arith.constant 0 : index
    %c1 = arith.constant 1 : index
    %17 = vector.load %arg4[%c0_11, %c1] : memref<120x512xf32, #tpu.memory_space<vmem>>, vector<16x384xf32>
    %c56 = arith.constant 56 : index
    %c19_12 = arith.constant 19 : index
    %18 = vector.load %arg4[%c56, %c19_12] : memref<120x512xf32, #tpu.memory_space<vmem>>, vector<8x384xf32>
    %19 = vector.extract_strided_slice %5 {offsets = [0, 0], sizes = [8, 384], strides = [1, 1]} : vector<16x384xf32> to vector<8x384xf32>
    %20 = vector.extract_strided_slice %17 {offsets = [0, 0], sizes = [8, 384], strides = [1, 1]} : vector<16x384xf32> to vector<8x384xf32>
    %21 = arith.mulf %19, %20 : vector<8x384xf32>
    %22 = arith.addf %18, %21 : vector<8x384xf32>
    %23 = vector.extract_strided_slice %5 {offsets = [8, 0], sizes = [8, 384], strides = [1, 1]} : vector<16x384xf32> to vector<8x384xf32>
    %24 = vector.extract_strided_slice %17 {offsets = [8, 0], sizes = [8, 384], strides = [1, 1]} : vector<16x384xf32> to vector<8x384xf32>
    %25 = arith.mulf %23, %24 : vector<8x384xf32>
    %26 = arith.addf %22, %25 : vector<8x384xf32>
    %c8 = arith.constant 8 : index
    %c0_13 = arith.constant 0 : index
    %27 = vector.load %arg5[%c8, %c0_13] : memref<72x384xf32, #tpu.memory_space<vmem>>, vector<8x384xf32>
    tpu.vector_store %arg5[%c8, %c0_13], %26 {strides = array<i32>} : memref<72x384xf32, #tpu.memory_space<vmem>>, vector<8x384xf32>,
    %28 = arith.maximumf %15, %26 : vector<8x384xf32>
    %c0_14 = arith.constant 0 : index
    %c2 = arith.constant 2 : index
    %29 = vector.load %arg4[%c0_14, %c2] : memref<120x512xf32, #tpu.memory_space<vmem>>, vector<16x384xf32>
    %c64 = arith.constant 64 : index
    %c19_15 = arith.constant 19 : index
    %30 = vector.load %arg4[%c64, %c19_15] : memref<120x512xf32, #tpu.memory_space<vmem>>, vector<8x384xf32>
    %31 = vector.extract_strided_slice %5 {offsets = [0, 0], sizes = [8, 384], strides = [1, 1]} : vector<16x384xf32> to vector<8x384xf32>
    %32 = vector.extract_strided_slice %29 {offsets = [0, 0], sizes = [8, 384], strides = [1, 1]} : vector<16x384xf32> to vector<8x384xf32>
    %33 = arith.mulf %31, %32 : vector<8x384xf32>
    %34 = arith.addf %30, %33 : vector<8x384xf32>
    %35 = vector.extract_strided_slice %5 {offsets = [8, 0], sizes = [8, 384], strides = [1, 1]} : vector<16x384xf32> to vector<8x384xf32>
    %36 = vector.extract_strided_slice %29 {offsets = [8, 0], sizes = [8, 384], strides = [1, 1]} : vector<16x384xf32> to vector<8x384xf32>
    %37 = arith.mulf %35, %36 : vector<8x384xf32>
    %38 = arith.addf %34, %37 : vector<8x384xf32>
    %c16 = arith.constant 16 : index
    %c0_16 = arith.constant 0 : index
    %39 = vector.load %arg5[%c16, %c0_16] : memref<72x384xf32, #tpu.memory_space<vmem>>, vector<8x384xf32>
    tpu.vector_store %arg5[%c16, %c0_16], %38 {strides = array<i32>} : memref<72x384xf32, #tpu.memory_space<vmem>>, vector<8x384xf32>,
    %40 = arith.maximumf %28, %38 : vector<8x384xf32>
    %c0_17 = arith.constant 0 : index
    %c18 = arith.constant 18 : index
    %41 = vector.load %arg4[%c0_17, %c18] : memref<120x512xf32, #tpu.memory_space<vmem>>, vector<16x384xf32>
    %c72 = arith.constant 72 : index
    %c19_18 = arith.constant 19 : index
    %42 = vector.load %arg4[%c72, %c19_18] : memref<120x512xf32, #tpu.memory_space<vmem>>, vector<8x384xf32>
    %43 = vector.extract_strided_slice %5 {offsets = [0, 0], sizes = [8, 384], strides = [1, 1]} : vector<16x384xf32> to vector<8x384xf32>
    %44 = vector.extract_strided_slice %41 {offsets = [0, 0], sizes = [8, 384], strides = [1, 1]} : vector<16x384xf32> to vector<8x384xf32>
    %45 = arith.mulf %43, %44 : vector<8x384xf32>
    %46 = arith.addf %42, %45 : vector<8x384xf32>
    %47 = vector.extract_strided_slice %5 {offsets = [8, 0], sizes = [8, 384], strides = [1, 1]} : vector<16x384xf32> to vector<8x384xf32>
    %48 = vector.extract_strided_slice %41 {offsets = [8, 0], sizes = [8, 384], strides = [1, 1]} : vector<16x384xf32> to vector<8x384xf32>
    %49 = arith.mulf %47, %48 : vector<8x384xf32>
    %50 = arith.addf %46, %49 : vector<8x384xf32>
    %c24 = arith.constant 24 : index
    %c0_19 = arith.constant 0 : index
    %51 = vector.load %arg5[%c24, %c0_19] : memref<72x384xf32, #tpu.memory_space<vmem>>, vector<8x384xf32>
    tpu.vector_store %arg5[%c24, %c0_19], %50 {strides = array<i32>} : memref<72x384xf32, #tpu.memory_space<vmem>>, vector<8x384xf32>,
    %52 = arith.maximumf %40, %50 : vector<8x384xf32>
    %c0_20 = arith.constant 0 : index
    %c19_21 = arith.constant 19 : index
    %53 = vector.load %arg4[%c0_20, %c19_21] : memref<120x512xf32, #tpu.memory_space<vmem>>, vector<16x384xf32>
    %c80 = arith.constant 80 : index
    %c19_22 = arith.constant 19 : index
    %54 = vector.load %arg4[%c80, %c19_22] : memref<120x512xf32, #tpu.memory_space<vmem>>, vector<8x384xf32>
    %55 = vector.extract_strided_slice %5 {offsets = [0, 0], sizes = [8, 384], strides = [1, 1]} : vector<16x384xf32> to vector<8x384xf32>
    %56 = vector.extract_strided_slice %53 {offsets = [0, 0], sizes = [8, 384], strides = [1, 1]} : vector<16x384xf32> to vector<8x384xf32>
    %57 = arith.mulf %55, %56 : vector<8x384xf32>
    %58 = arith.addf %54, %57 : vector<8x384xf32>
    %59 = vector.extract_strided_slice %5 {offsets = [8, 0], sizes = [8, 384], strides = [1, 1]} : vector<16x384xf32> to vector<8x384xf32>
    %60 = vector.extract_strided_slice %53 {offsets = [8, 0], sizes = [8, 384], strides = [1, 1]} : vector<16x384xf32> to vector<8x384xf32>
    %61 = arith.mulf %59, %60 : vector<8x384xf32>
    %62 = arith.addf %58, %61 : vector<8x384xf32>
    %c32_23 = arith.constant 32 : index
    %c0_24 = arith.constant 0 : index
    %63 = vector.load %arg5[%c32_23, %c0_24] : memref<72x384xf32, #tpu.memory_space<vmem>>, vector<8x384xf32>
    tpu.vector_store %arg5[%c32_23, %c0_24], %62 {strides = array<i32>} : memref<72x384xf32, #tpu.memory_space<vmem>>, vector<8x384xf32>,
    %64 = arith.maximumf %52, %62 : vector<8x384xf32>
    %c0_25 = arith.constant 0 : index
    %c20 = arith.constant 20 : index
    %65 = vector.load %arg4[%c0_25, %c20] : memref<120x512xf32, #tpu.memory_space<vmem>>, vector<16x384xf32>
    %c88 = arith.constant 88 : index
    %c19_26 = arith.constant 19 : index
    %66 = vector.load %arg4[%c88, %c19_26] : memref<120x512xf32, #tpu.memory_space<vmem>>, vector<8x384xf32>
    %67 = vector.extract_strided_slice %5 {offsets = [0, 0], sizes = [8, 384], strides = [1, 1]} : vector<16x384xf32> to vector<8x384xf32>
    %68 = vector.extract_strided_slice %65 {offsets = [0, 0], sizes = [8, 384], strides = [1, 1]} : vector<16x384xf32> to vector<8x384xf32>
    %69 = arith.mulf %67, %68 : vector<8x384xf32>
    %70 = arith.addf %66, %69 : vector<8x384xf32>
    %71 = vector.extract_strided_slice %5 {offsets = [8, 0], sizes = [8, 384], strides = [1, 1]} : vector<16x384xf32> to vector<8x384xf32>
    %72 = vector.extract_strided_slice %65 {offsets = [8, 0], sizes = [8, 384], strides = [1, 1]} : vector<16x384xf32> to vector<8x384xf32>
    %73 = arith.mulf %71, %72 : vector<8x384xf32>
    %74 = arith.addf %70, %73 : vector<8x384xf32>
    %c40 = arith.constant 40 : index
    %c0_27 = arith.constant 0 : index
    %75 = vector.load %arg5[%c40, %c0_27] : memref<72x384xf32, #tpu.memory_space<vmem>>, vector<8x384xf32>
    tpu.vector_store %arg5[%c40, %c0_27], %74 {strides = array<i32>} : memref<72x384xf32, #tpu.memory_space<vmem>>, vector<8x384xf32>,
    %76 = arith.maximumf %64, %74 : vector<8x384xf32>
    %c0_28 = arith.constant 0 : index
    %c36 = arith.constant 36 : index
    %77 = vector.load %arg4[%c0_28, %c36] : memref<120x512xf32, #tpu.memory_space<vmem>>, vector<16x384xf32>
    %c96 = arith.constant 96 : index
    %c19_29 = arith.constant 19 : index
    %78 = vector.load %arg4[%c96, %c19_29] : memref<120x512xf32, #tpu.memory_space<vmem>>, vector<8x384xf32>
    %79 = vector.extract_strided_slice %5 {offsets = [0, 0], sizes = [8, 384], strides = [1, 1]} : vector<16x384xf32> to vector<8x384xf32>
    %80 = vector.extract_strided_slice %77 {offsets = [0, 0], sizes = [8, 384], strides = [1, 1]} : vector<16x384xf32> to vector<8x384xf32>
    %81 = arith.mulf %79, %80 : vector<8x384xf32>
    %82 = arith.addf %78, %81 : vector<8x384xf32>
    %83 = vector.extract_strided_slice %5 {offsets = [8, 0], sizes = [8, 384], strides = [1, 1]} : vector<16x384xf32> to vector<8x384xf32>
    %84 = vector.extract_strided_slice %77 {offsets = [8, 0], sizes = [8, 384], strides = [1, 1]} : vector<16x384xf32> to vector<8x384xf32>
    %85 = arith.mulf %83, %84 : vector<8x384xf32>
    %86 = arith.addf %82, %85 : vector<8x384xf32>
    %c48_30 = arith.constant 48 : index
    %c0_31 = arith.constant 0 : index
    %87 = vector.load %arg5[%c48_30, %c0_31] : memref<72x384xf32, #tpu.memory_space<vmem>>, vector<8x384xf32>
    tpu.vector_store %arg5[%c48_30, %c0_31], %86 {strides = array<i32>} : memref<72x384xf32, #tpu.memory_space<vmem>>, vector<8x384xf32>,
    %88 = arith.maximumf %76, %86 : vector<8x384xf32>
    %c0_32 = arith.constant 0 : index
    %c37 = arith.constant 37 : index
    %89 = vector.load %arg4[%c0_32, %c37] : memref<120x512xf32, #tpu.memory_space<vmem>>, vector<16x384xf32>
    %c104 = arith.constant 104 : index
    %c19_33 = arith.constant 19 : index
    %90 = vector.load %arg4[%c104, %c19_33] : memref<120x512xf32, #tpu.memory_space<vmem>>, vector<8x384xf32>
    %91 = vector.extract_strided_slice %5 {offsets = [0, 0], sizes = [8, 384], strides = [1, 1]} : vector<16x384xf32> to vector<8x384xf32>
    %92 = vector.extract_strided_slice %89 {offsets = [0, 0], sizes = [8, 384], strides = [1, 1]} : vector<16x384xf32> to vector<8x384xf32>
    %93 = arith.mulf %91, %92 : vector<8x384xf32>
    %94 = arith.addf %90, %93 : vector<8x384xf32>
    %95 = vector.extract_strided_slice %5 {offsets = [8, 0], sizes = [8, 384], strides = [1, 1]} : vector<16x384xf32> to vector<8x384xf32>
    %96 = vector.extract_strided_slice %89 {offsets = [8, 0], sizes = [8, 384], strides = [1, 1]} : vector<16x384xf32> to vector<8x384xf32>
    %97 = arith.mulf %95, %96 : vector<8x384xf32>
    %98 = arith.addf %94, %97 : vector<8x384xf32>
    %c56_34 = arith.constant 56 : index
    %c0_35 = arith.constant 0 : index
    %99 = vector.load %arg5[%c56_34, %c0_35] : memref<72x384xf32, #tpu.memory_space<vmem>>, vector<8x384xf32>
    tpu.vector_store %arg5[%c56_34, %c0_35], %98 {strides = array<i32>} : memref<72x384xf32, #tpu.memory_space<vmem>>, vector<8x384xf32>,
    %100 = arith.maximumf %88, %98 : vector<8x384xf32>
    %c0_36 = arith.constant 0 : index
    %c38 = arith.constant 38 : index
    %101 = vector.load %arg4[%c0_36, %c38] : memref<120x512xf32, #tpu.memory_space<vmem>>, vector<16x384xf32>
    %c112 = arith.constant 112 : index
    %c19_37 = arith.constant 19 : index
    %102 = vector.load %arg4[%c112, %c19_37] : memref<120x512xf32, #tpu.memory_space<vmem>>, vector<8x384xf32>
    %103 = vector.extract_strided_slice %5 {offsets = [0, 0], sizes = [8, 384], strides = [1, 1]} : vector<16x384xf32> to vector<8x384xf32>
    %104 = vector.extract_strided_slice %101 {offsets = [0, 0], sizes = [8, 384], strides = [1, 1]} : vector<16x384xf32> to vector<8x384xf32>
    %105 = arith.mulf %103, %104 : vector<8x384xf32>
    %106 = arith.addf %102, %105 : vector<8x384xf32>
    %107 = vector.extract_strided_slice %5 {offsets = [8, 0], sizes = [8, 384], strides = [1, 1]} : vector<16x384xf32> to vector<8x384xf32>
    %108 = vector.extract_strided_slice %101 {offsets = [8, 0], sizes = [8, 384], strides = [1, 1]} : vector<16x384xf32> to vector<8x384xf32>
    %109 = arith.mulf %107, %108 : vector<8x384xf32>
    %110 = arith.addf %106, %109 : vector<8x384xf32>
    %c64_38 = arith.constant 64 : index
    %c0_39 = arith.constant 0 : index
    %111 = vector.load %arg5[%c64_38, %c0_39] : memref<72x384xf32, #tpu.memory_space<vmem>>, vector<8x384xf32>
    tpu.vector_store %arg5[%c64_38, %c0_39], %110 {strides = array<i32>} : memref<72x384xf32, #tpu.memory_space<vmem>>, vector<8x384xf32>,
    %112 = arith.maximumf %100, %110 : vector<8x384xf32>
    %cst_40 = arith.constant 0.000000e+00 : f32
    %113 = vector.broadcast %cst_40 : f32 to vector<8x384xf32>
    %cst_41 = arith.constant 0.000000e+00 : f32
    %114 = vector.broadcast %cst_41 : f32 to vector<8x384xf32>
    %cst_42 = arith.constant 0.000000e+00 : f32
    %115 = vector.broadcast %cst_42 : f32 to vector<8x384xf32>
    %c0_43 = arith.constant 0 : index
    %c0_44 = arith.constant 0 : index
    %116 = vector.load %arg5[%c0_43, %c0_44] : memref<72x384xf32, #tpu.memory_space<vmem>>, vector<8x384xf32>
    %117 = arith.subf %116, %112 : vector<8x384xf32>
    %118 = math.exp %117 : vector<8x384xf32>
    %119 = arith.addf %113, %118 : vector<8x384xf32>
    %c16_45 = arith.constant 16 : index
    %c0_46 = arith.constant 0 : index
    %120 = vector.load %arg4[%c16_45, %c0_46] : memref<120x512xf32, #tpu.memory_space<vmem>>, vector<16x384xf32>
    %121 = vector.extract_strided_slice %120 {offsets = [0, 0], sizes = [8, 384], strides = [1, 1]} : vector<16x384xf32> to vector<8x384xf32>
    %122 = arith.mulf %118, %121 : vector<8x384xf32>
    %123 = arith.addf %114, %122 : vector<8x384xf32>
    %124 = vector.extract_strided_slice %120 {offsets = [8, 0], sizes = [8, 384], strides = [1, 1]} : vector<16x384xf32> to vector<8x384xf32>
    %125 = arith.mulf %118, %124 : vector<8x384xf32>
    %126 = arith.addf %115, %125 : vector<8x384xf32>
    %c8_47 = arith.constant 8 : index
    %c0_48 = arith.constant 0 : index
    %127 = vector.load %arg5[%c8_47, %c0_48] : memref<72x384xf32, #tpu.memory_space<vmem>>, vector<8x384xf32>
    %128 = arith.subf %127, %112 : vector<8x384xf32>
    %129 = math.exp %128 : vector<8x384xf32>
    %130 = arith.addf %119, %129 : vector<8x384xf32>
    %c16_49 = arith.constant 16 : index
    %c1_50 = arith.constant 1 : index
    %131 = vector.load %arg4[%c16_49, %c1_50] : memref<120x512xf32, #tpu.memory_space<vmem>>, vector<16x384xf32>
    %132 = vector.extract_strided_slice %131 {offsets = [0, 0], sizes = [8, 384], strides = [1, 1]} : vector<16x384xf32> to vector<8x384xf32>
    %133 = arith.mulf %129, %132 : vector<8x384xf32>
    %134 = arith.addf %123, %133 : vector<8x384xf32>
    %135 = vector.extract_strided_slice %131 {offsets = [8, 0], sizes = [8, 384], strides = [1, 1]} : vector<16x384xf32> to vector<8x384xf32>
    %136 = arith.mulf %129, %135 : vector<8x384xf32>
    %137 = arith.addf %126, %136 : vector<8x384xf32>
    %c16_51 = arith.constant 16 : index
    %c0_52 = arith.constant 0 : index
    %138 = vector.load %arg5[%c16_51, %c0_52] : memref<72x384xf32, #tpu.memory_space<vmem>>, vector<8x384xf32>
    %139 = arith.subf %138, %112 : vector<8x384xf32>
    %140 = math.exp %139 : vector<8x384xf32>
    %141 = arith.addf %130, %140 : vector<8x384xf32>
    %c16_53 = arith.constant 16 : index
    %c2_54 = arith.constant 2 : index
    %142 = vector.load %arg4[%c16_53, %c2_54] : memref<120x512xf32, #tpu.memory_space<vmem>>, vector<16x384xf32>
    %143 = vector.extract_strided_slice %142 {offsets = [0, 0], sizes = [8, 384], strides = [1, 1]} : vector<16x384xf32> to vector<8x384xf32>
    %144 = arith.mulf %140, %143 : vector<8x384xf32>
    %145 = arith.addf %134, %144 : vector<8x384xf32>
    %146 = vector.extract_strided_slice %142 {offsets = [8, 0], sizes = [8, 384], strides = [1, 1]} : vector<16x384xf32> to vector<8x384xf32>
    %147 = arith.mulf %140, %146 : vector<8x384xf32>
    %148 = arith.addf %137, %147 : vector<8x384xf32>
    %c24_55 = arith.constant 24 : index
    %c0_56 = arith.constant 0 : index
    %149 = vector.load %arg5[%c24_55, %c0_56] : memref<72x384xf32, #tpu.memory_space<vmem>>, vector<8x384xf32>
    %150 = arith.subf %149, %112 : vector<8x384xf32>
    %151 = math.exp %150 : vector<8x384xf32>
    %152 = arith.addf %141, %151 : vector<8x384xf32>
    %c16_57 = arith.constant 16 : index
    %c18_58 = arith.constant 18 : index
    %153 = vector.load %arg4[%c16_57, %c18_58] : memref<120x512xf32, #tpu.memory_space<vmem>>, vector<16x384xf32>
    %154 = vector.extract_strided_slice %153 {offsets = [0, 0], sizes = [8, 384], strides = [1, 1]} : vector<16x384xf32> to vector<8x384xf32>
    %155 = arith.mulf %151, %154 : vector<8x384xf32>
    %156 = arith.addf %145, %155 : vector<8x384xf32>
    %157 = vector.extract_strided_slice %153 {offsets = [8, 0], sizes = [8, 384], strides = [1, 1]} : vector<16x384xf32> to vector<8x384xf32>
    %158 = arith.mulf %151, %157 : vector<8x384xf32>
    %159 = arith.addf %148, %158 : vector<8x384xf32>
    %c32_59 = arith.constant 32 : index
    %c0_60 = arith.constant 0 : index
    %160 = vector.load %arg5[%c32_59, %c0_60] : memref<72x384xf32, #tpu.memory_space<vmem>>, vector<8x384xf32>
    %161 = arith.subf %160, %112 : vector<8x384xf32>
    %162 = math.exp %161 : vector<8x384xf32>
    %163 = arith.addf %152, %162 : vector<8x384xf32>
    %c16_61 = arith.constant 16 : index
    %c19_62 = arith.constant 19 : index
    %164 = vector.load %arg4[%c16_61, %c19_62] : memref<120x512xf32, #tpu.memory_space<vmem>>, vector<16x384xf32>
    %165 = vector.extract_strided_slice %164 {offsets = [0, 0], sizes = [8, 384], strides = [1, 1]} : vector<16x384xf32> to vector<8x384xf32>
    %166 = arith.mulf %162, %165 : vector<8x384xf32>
    %167 = arith.addf %156, %166 : vector<8x384xf32>
    %168 = vector.extract_strided_slice %164 {offsets = [8, 0], sizes = [8, 384], strides = [1, 1]} : vector<16x384xf32> to vector<8x384xf32>
    %169 = arith.mulf %162, %168 : vector<8x384xf32>
    %170 = arith.addf %159, %169 : vector<8x384xf32>
    %c40_63 = arith.constant 40 : index
    %c0_64 = arith.constant 0 : index
    %171 = vector.load %arg5[%c40_63, %c0_64] : memref<72x384xf32, #tpu.memory_space<vmem>>, vector<8x384xf32>
    %172 = arith.subf %171, %112 : vector<8x384xf32>
    %173 = math.exp %172 : vector<8x384xf32>
    %174 = arith.addf %163, %173 : vector<8x384xf32>
    %c16_65 = arith.constant 16 : index
    %c20_66 = arith.constant 20 : index
    %175 = vector.load %arg4[%c16_65, %c20_66] : memref<120x512xf32, #tpu.memory_space<vmem>>, vector<16x384xf32>
    %176 = vector.extract_strided_slice %175 {offsets = [0, 0], sizes = [8, 384], strides = [1, 1]} : vector<16x384xf32> to vector<8x384xf32>
    %177 = arith.mulf %173, %176 : vector<8x384xf32>
    %178 = arith.addf %167, %177 : vector<8x384xf32>
    %179 = vector.extract_strided_slice %175 {offsets = [8, 0], sizes = [8, 384], strides = [1, 1]} : vector<16x384xf32> to vector<8x384xf32>
    %180 = arith.mulf %173, %179 : vector<8x384xf32>
    %181 = arith.addf %170, %180 : vector<8x384xf32>
    %c48_67 = arith.constant 48 : index
    %c0_68 = arith.constant 0 : index
    %182 = vector.load %arg5[%c48_67, %c0_68] : memref<72x384xf32, #tpu.memory_space<vmem>>, vector<8x384xf32>
    %183 = arith.subf %182, %112 : vector<8x384xf32>
    %184 = math.exp %183 : vector<8x384xf32>
    %185 = arith.addf %174, %184 : vector<8x384xf32>
    %c16_69 = arith.constant 16 : index
    %c36_70 = arith.constant 36 : index
    %186 = vector.load %arg4[%c16_69, %c36_70] : memref<120x512xf32, #tpu.memory_space<vmem>>, vector<16x384xf32>
    %187 = vector.extract_strided_slice %186 {offsets = [0, 0], sizes = [8, 384], strides = [1, 1]} : vector<16x384xf32> to vector<8x384xf32>
    %188 = arith.mulf %184, %187 : vector<8x384xf32>
    %189 = arith.addf %178, %188 : vector<8x384xf32>
    %190 = vector.extract_strided_slice %186 {offsets = [8, 0], sizes = [8, 384], strides = [1, 1]} : vector<16x384xf32> to vector<8x384xf32>
    %191 = arith.mulf %184, %190 : vector<8x384xf32>
    %192 = arith.addf %181, %191 : vector<8x384xf32>
    %c56_71 = arith.constant 56 : index
    %c0_72 = arith.constant 0 : index
    %193 = vector.load %arg5[%c56_71, %c0_72] : memref<72x384xf32, #tpu.memory_space<vmem>>, vector<8x384xf32>
    %194 = arith.subf %193, %112 : vector<8x384xf32>
    %195 = math.exp %194 : vector<8x384xf32>
    %196 = arith.addf %185, %195 : vector<8x384xf32>
    %c16_73 = arith.constant 16 : index
    %c37_74 = arith.constant 37 : index
    %197 = vector.load %arg4[%c16_73, %c37_74] : memref<120x512xf32, #tpu.memory_space<vmem>>, vector<16x384xf32>
    %198 = vector.extract_strided_slice %197 {offsets = [0, 0], sizes = [8, 384], strides = [1, 1]} : vector<16x384xf32> to vector<8x384xf32>
    %199 = arith.mulf %195, %198 : vector<8x384xf32>
    %200 = arith.addf %189, %199 : vector<8x384xf32>
    %201 = vector.extract_strided_slice %197 {offsets = [8, 0], sizes = [8, 384], strides = [1, 1]} : vector<16x384xf32> to vector<8x384xf32>
    %202 = arith.mulf %195, %201 : vector<8x384xf32>
    %203 = arith.addf %192, %202 : vector<8x384xf32>
    %c64_75 = arith.constant 64 : index
    %c0_76 = arith.constant 0 : index
    %204 = vector.load %arg5[%c64_75, %c0_76] : memref<72x384xf32, #tpu.memory_space<vmem>>, vector<8x384xf32>
    %205 = arith.subf %204, %112 : vector<8x384xf32>
    %206 = math.exp %205 : vector<8x384xf32>
    %207 = arith.addf %196, %206 : vector<8x384xf32>
    %c16_77 = arith.constant 16 : index
    %c38_78 = arith.constant 38 : index
    %208 = vector.load %arg4[%c16_77, %c38_78] : memref<120x512xf32, #tpu.memory_space<vmem>>, vector<16x384xf32>
    %209 = vector.extract_strided_slice %208 {offsets = [0, 0], sizes = [8, 384], strides = [1, 1]} : vector<16x384xf32> to vector<8x384xf32>
    %210 = arith.mulf %206, %209 : vector<8x384xf32>
    %211 = arith.addf %200, %210 : vector<8x384xf32>
    %212 = vector.extract_strided_slice %208 {offsets = [8, 0], sizes = [8, 384], strides = [1, 1]} : vector<16x384xf32> to vector<8x384xf32>
    %213 = arith.mulf %206, %212 : vector<8x384xf32>
    %214 = arith.addf %203, %213 : vector<8x384xf32>
    %215 = tpu.reciprocal %207 : vector<8x384xf32> -> vector<8x384xf32>
    %216 = arith.mulf %211, %215 : vector<8x384xf32>
    %c0_79 = arith.constant 0 : index
    %c0_80 = arith.constant 0 : index
    %c0_81 = arith.constant 0 : index
    %217 = vector.load %arg3[%c0_79, %c0_80, %c0_81] : memref<1x16x384xf32, #tpu.memory_space<vmem>>, vector<1x8x384xf32>
    %218 = vector.shape_cast %217 : vector<1x8x384xf32> to vector<8x384xf32>
    %219 = vector.shape_cast %216 : vector<8x384xf32> to vector<1x8x384xf32>
    tpu.vector_store %arg3[%c0_79, %c0_80, %c0_81], %219 {strides = array<i32>} : memref<1x16x384xf32, #tpu.memory_space<vmem>>, vector<1x8x384xf32>,
    %220 = arith.mulf %214, %215 : vector<8x384xf32>
    %c0_82 = arith.constant 0 : index
    %c8_83 = arith.constant 8 : index
    %c0_84 = arith.constant 0 : index
    %221 = vector.load %arg3[%c0_82, %c8_83, %c0_84] : memref<1x16x384xf32, #tpu.memory_space<vmem>>, vector<1x8x384xf32>
    %222 = vector.shape_cast %221 : vector<1x8x384xf32> to vector<8x384xf32>
    %223 = vector.shape_cast %220 : vector<8x384xf32> to vector<1x8x384xf32>
    tpu.vector_store %arg3[%c0_82, %c8_83, %c0_84], %223 {strides = array<i32>} : memref<1x16x384xf32, #tpu.memory_space<vmem>>, vector<1x8x384xf32>,
    return
  }
  func.func @transform_0(%arg0: i32) -> (i32, i32, i32) {
    %c0_i32 = arith.constant 0 : i32
    %c0_i32_0 = arith.constant 0 : i32
    %c0_i32_1 = arith.constant 0 : i32
    return %arg0, %c0_i32, %c0_i32_0 : i32, i32, i32
  }
  func.func @transform_1(%arg0: i32) -> (i32, i32) {
    %c0_i32 = arith.constant 0 : i32
    %c0_i32_0 = arith.constant 0 : i32
    %c0_i32_1 = arith.constant 0 : i32
    return %c0_i32, %c0_i32_0 : i32, i32
  }
  func.func @transform_2(%arg0: i32) -> (i32, i32, i32) {
    %c0_i32 = arith.constant 0 : i32
    %c0_i32_0 = arith.constant 0 : i32
    %c0_i32_1 = arith.constant 0 : i32
    return %arg0, %c0_i32, %c0_i32_0 : i32, i32, i32
  }
}

</mosaic_0001>

<llo_original>
// kernel: tpu_custom_call.1
$region0: #{tpu_custom_call.1}
  #allocation0 [shape = 'u32[]', space=smem, size = 0x4, offset = 0x4, fixed_abs, tag = 'smem constant byte address 0x4 - core index']
  #allocation1 [shape = 'u32[144,128]{1,0:T(1,128)}', space=vmem, size = 0x12000, scoped, tag = 'internal scratch']
  #allocation2 [shape = 'f32[120,512]{1,0:T(8,128)}', space=vmem, size = 0x3c000, scoped, tag = 'scratch operand']
  #allocation3 [shape = 'f32[72,384]{1,0:T(8,128)}', space=vmem, size = 0x1b000, scoped, tag = 'scratch operand']
  %s0 = inlined_call_operand.vmem [shape: f32[2,16,512], index: 0, kind: input, shape index: {}]
  %s1 = inlined_call_operand.vmem [shape: f32[120,16], index: 1, kind: input, shape index: {}]
  %s2 = inlined_call_operand.hbm [shape: f32[2,16,384], index: 2, kind: output, shape index: {}]
  %s3 = sld [smem:[#allocation0]]
  $region41: #{tpu_custom_call.1} parent=0
    _
  %s5 = ssub.s32 1, %s3
  %s6 = scalar_select 0, %s5, %s3
  $region1: #{tpu_custom_call.1} parent=0
    #allocation4 [shape = 'u8[49152]{0}', space=vmem, size = 0xc000, scoped, tag = 'output window, operand 0']
    #allocation5 [shape = 's32[2]{0}', space=sflag, size = 0x8, scoped, tag = 'scoped memory for tpu_custom_call.1']
    %7 = vsyncpa [#allocation5], 0
    %s8 = scalar_lea.sflag [#allocation5], 1
    %9 = vsyncpa %s8, 0
    loop: start=0, step=1, limit=4
    $region2: #{tpu_custom_call.1} parent=1 // loop_pre_header
      _
    $region3: #{tpu_custom_call.1} parent=1 // loop_header
      %s11 = sphi 0, %s15
      %p12 = scmp.ge.s32.totalorder %s11, 4
      %s21 = sphi 0, %s23
      %s24 = sphi 0, %s21
      %s25 = sphi 0, %s24
      %s41 = sphi 0, %s25
      %s45 = sphi 0, %s45
      %s47 = sphi 0, %s45
      %s48 = sphi 0, %s47
      %s62 = sphi 0, %s48
      %s68 = sphi 0, %s70
      %s71 = sphi 0, %s68
      %s72 = sphi 0, %s71
      %s88 = sphi 0, %s72
    $region4: #{tpu_custom_call.1} parent=1 // loop_header_branch
      %14 = sbr.rel (%p12) target = $region8
    $region5: #{tpu_custom_call.1} parent=1 // loop_body
      %s16 = ssub.s32 %s11, 1
      %s17 = ssub.s32 %s11, 2
      %s18 = sadd.s32 %s11, 1
      %s19 = ssub.s32 %s11, %s18
      %p20 = scmp.eq.s32.totalorder %s19, 0
      %s22 = sadd.s32 %s21, 1
      %s23 = scalar_select %p20, %s21, %s22
      %p26 = pneg %p20
      %p27 = scmp.eq.s32.totalorder %s11, 1
      %p28 = por %p26, %p27
      %p29 = scmp.ne.s32.totalorder %s21, %s24
      %p30 = scmp.eq.s32.totalorder %s11, 0
      %p31 = por %p29, %p30
      %p32 = scmp.ne.s32.totalorder %s21, %s24
      %p33 = scmp.eq.s32.totalorder %s16, 1
      %p34 = por %p32, %p33
      %p35 = scmp.ne.s32.totalorder %s24, %s25
      %p36 = scmp.eq.s32.totalorder %s16, 0
      %p37 = por %p35, %p36
      %p38 = scmp.ne.s32.totalorder %s24, %s25
      %p39 = scmp.eq.s32.totalorder %s17, 1
      %p40 = por %p38, %p39
      %p42 = scmp.ne.s32.totalorder %s25, %s41
      %p43 = scmp.eq.s32.totalorder %s17, 0
      %p44 = por %p42, %p43
      %s46 = sadd.s32 %s45, 1
      %p49 = scmp.eq.s32.totalorder %s11, 1
      %p50 = scmp.ne.s32.totalorder %s45, %s47
      %p51 = scmp.eq.s32.totalorder %s11, 0
      %p52 = por %p50, %p51
      %p53 = scmp.ne.s32.totalorder %s45, %s47
      %p54 = scmp.eq.s32.totalorder %s16, 1
      %p55 = por %p53, %p54
      %p56 = scmp.ne.s32.totalorder %s47, %s48
      %p57 = scmp.eq.s32.totalorder %s16, 0
      %p58 = por %p56, %p57
      %p59 = scmp.ne.s32.totalorder %s47, %s48
      %p60 = scmp.eq.s32.totalorder %s17, 1
      %p61 = por %p59, %p60
      %p63 = scmp.ne.s32.totalorder %s48, %s62
      %p64 = scmp.eq.s32.totalorder %s17, 0
      %p65 = por %p63, %p64
      %s66 = ssub.s32 %s11, %s18
      %p67 = scmp.eq.s32.totalorder %s66, 0
      %s69 = sadd.s32 %s68, 1
      %s70 = scalar_select %p67, %s68, %s69
      %p73 = pneg %p67
      %p74 = scmp.eq.s32.totalorder %s11, 1
      %p75 = por %p73, %p74
      %p76 = scmp.ne.s32.totalorder %s68, %s71
      %p77 = scmp.eq.s32.totalorder %s11, 0
      %p78 = por %p76, %p77
      %p79 = scmp.ne.s32.totalorder %s68, %s71
      %p80 = scmp.eq.s32.totalorder %s16, 1
      %p81 = por %p79, %p80
      %p82 = scmp.ne.s32.totalorder %s71, %s72
      %p83 = scmp.eq.s32.totalorder %s16, 0
      %p84 = por %p82, %p83
      %p85 = scmp.ne.s32.totalorder %s71, %s72
      %p86 = scmp.eq.s32.totalorder %s17, 1
      %p87 = por %p85, %p86
      %p89 = scmp.ne.s32.totalorder %s72, %s88
      %p90 = scmp.eq.s32.totalorder %s17, 0
      %p91 = por %p89, %p90
      %p92 = scmp.le.s32.totalorder 1, %s11
      %p93 = scmp.lt.s32.totalorder %s11, 3
      %p94 = pnand %p92, %p93
      %p95 = pneg %p94
      // Predicated region
      $region9: #{tpu_custom_call.1} parent=5 // pred_check
        _
      $region10: #{tpu_custom_call.1} parent=5 // pred_check_branch
        %97 = sbr.rel (%p94) target = $region12
      $region11: #{tpu_custom_call.1} parent=5 // pred_region
        %s98 = ssub.s32 %s11, 1
        // Predicated region
        $region13: #{tpu_custom_call.1} parent=11 // pred_check
          %p99 = pneg %p58
        $region14: #{tpu_custom_call.1} parent=11 // pred_check_branch
          %101 = sbr.rel (%p99) target = $region16
        $region15: #{tpu_custom_call.1} parent=11 // pred_region
          _
        $region16: #{tpu_custom_call.1} parent=11 // pred_fallthru
          _
      $region12: #{tpu_custom_call.1} parent=5 // pred_fallthru
        _
      %p102 = scmp.lt.s32.totalorder %s11, 2
      // Predicated region
      $region17: #{tpu_custom_call.1} parent=5 // pred_check
        %p103 = pneg %p102
      $region18: #{tpu_custom_call.1} parent=5 // pred_check_branch
        %105 = sbr.rel (%p103) target = $region20
      $region19: #{tpu_custom_call.1} parent=5 // pred_region
        // Predicated region
        $region21: #{tpu_custom_call.1} parent=19 // pred_check
          %p106 = pneg %p31
        $region22: #{tpu_custom_call.1} parent=19 // pred_check_branch
          %108 = sbr.rel (%p106) target = $region24
        $region23: #{tpu_custom_call.1} parent=19 // pred_region
          %p109 = scmp.lt.s32.totalorder %s11, 1
          %s110 = scalar_select %p109, %s11, 1
          %s111 = smul.addr %s110, 8
          %s112 = smul.addr %s111, 8
          %s113 = scalar_lea.vmem %s0, %s112
        $region24: #{tpu_custom_call.1} parent=19 // pred_fallthru
          _
      $region20: #{tpu_custom_call.1} parent=5 // pred_fallthru
        _
      %p114 = scmp.le.s32.totalorder 1, %s11
      %p115 = scmp.lt.s32.totalorder %s11, 3
      %p116 = pnand %p114, %p115
      %p117 = pneg %p116
      // Predicated region
      $region25: #{tpu_custom_call.1} parent=5 // pred_check
        _
      $region26: #{tpu_custom_call.1} parent=5 // pred_check_branch
        %119 = sbr.rel (%p116) target = $region28
      $region27: #{tpu_custom_call.1} parent=5 // pred_region
        %s120 = ssub.s32 %s11, 1
        %p121 = scmp.lt.s32.totalorder %s16, 1
        %s122 = scalar_select %p121, %s16, 1
        %s123 = smul.addr %s122, 8
        %s124 = smul.addr %s123, 8
        %s125 = scalar_lea.vmem %s0, %s124
        %p126 = pneg %p37
        %p127 = pneg %p34
        %p128 = pneg %p58
        %p129 = pneg %p55
        %p130 = pneg %p84
        %p131 = pneg %p81
        %s132 = sand.u32 %s71, 1
        %s133 = scalar_lea.sflag [#allocation5], %s132
        %s134 = sand.u32 %s71, 1
        %s135 = smul.addr %s134, 48
        %s136 = scalar_lea.vmem [#allocation4], %s135
        %p137 = scmp.lt.s32.totalorder %s16, 1
        %s138 = scalar_select %p137, %s16, 1
        %s139 = smul.addr %s138, 8
        %s140 = smul.addr %s139, 8
        %s141 = scalar_lea.vmem %s0, %s140
        %v142 = vld [vmem:[%s1] sm:$0xff]
        %v143 = vld [vmem:[%s1 + $0x8] sm:$0xff]
        %v144 = vld [vmem:[%s1 + $0x10] sm:$0xff]
        %v145 = vld [vmem:[%s1 + $0x18] sm:$0xff]
        %v146 = vld [vmem:[%s1 + $0x20] sm:$0xff]
        %v147 = vld [vmem:[%s1 + $0x28] sm:$0xff]
        %v148 = vld [vmem:[%s1 + $0x30] sm:$0xff]
        %v149 = vld [vmem:[%s1 + $0x38] sm:$0xff]
        %v150 = vld [vmem:[%s1 + $0x40] sm:$0xff]
        %v151 = vld [vmem:[%s1 + $0x48] sm:$0xff]
        %v152 = vld [vmem:[%s1 + $0x50] sm:$0xff]
        %v153 = vld [vmem:[%s1 + $0x58] sm:$0xff]
        %v154 = vld [vmem:[%s1 + $0x60] sm:$0xff]
        %v155 = vld [vmem:[%s1 + $0x68] sm:$0xff]
        %v156 = vld [vmem:[%s1 + $0x70] sm:$0xff]
        %v157 = vld [vmem:[%s141] sm:$0xff]
        %v158 = vld [vmem:[%s141 + $0x8] sm:$0xff]
        %v159 = vld [vmem:[%s141 + $0x10] sm:$0xff]
        %v160 = vld [vmem:[%s141 + $0x18] sm:$0xff]
        %v161 = vld [vmem:[%s141 + $0x20] sm:$0xff]
        %v162 = vld [vmem:[%s141 + $0x28] sm:$0xff]
        %v163 = vld [vmem:[%s141 + $0x30] sm:$0xff]
        %v164 = vld [vmem:[%s141 + $0x38] sm:$0xff]
        %vm165 = vcmask 130048
        %v167 = vsel %vm165, %v142, 0
        %v170 = vsel %vm165, %v143, 0
        %v173 = vsel %vm165, %v144, 0
        %v176 = vsel %vm165, %v145, 0
        %v179 = vsel %vm165, %v146, 0
        %v182 = vsel %vm165, %v147, 0
        %v185 = vsel %vm165, %v148, 0
        %v188 = vsel %vm165, %v149, 0
        %v191 = vsel %vm165, %v150, 0
        %v194 = vsel %vm165, %v151, 0
        %v197 = vsel %vm165, %v152, 0
        %v200 = vsel %vm165, %v153, 0
        %v203 = vsel %vm165, %v154, 0
        %v206 = vsel %vm165, %v155, 0
        %v209 = vsel %vm165, %v156, 0
        %211 = vmatprep.subr.mxu0 %v158
        %212 = vmatpush1.msra.mxu0 %v157
        %213 = vmatprep.subr.mxu0 %v162
        %214 = vmatpush1.msra.mxu0 %v161
        %215 = vmatprep.subr.mxu0 0.0
        %216 = vmatpush1.msra.mxu0 0.0
        %217 = vmatprep.subr.mxu0 0.0
        %218 = vmatpush1.msra.mxu0 0.0
        %219 = vmatprep.subr.mxu0 0.0
        %220 = vmatpush1.msra.mxu0 0.0
        %221 = vmatprep.subr.mxu0 0.0
        %222 = vmatpush1.msra.mxu0 0.0
        %223 = vmatprep.subr.mxu0 0.0
        %224 = vmatpush1.msra.mxu0 0.0
        %225 = vmatprep.subr.mxu0 0.0
        %226 = vmatpush1.msra.mxu0 0.0
        %227 = vmatprep.subr.mxu0 0.0
        %228 = vmatpush1.msra.mxu0 0.0
        %229 = vmatprep.subr.mxu0 0.0
        %230 = vmatpush1.msra.mxu0 0.0
        %231 = vmatprep.subr.mxu0 0.0
        %232 = vmatpush1.msra.mxu0 0.0
        %233 = vmatprep.subr.mxu0 0.0
        %234 = vmatpush1.msra.mxu0 0.0
        %235 = vmatprep.subr.mxu0 0.0
        %236 = vmatpush1.msra.mxu0 0.0
        %237 = vmatprep.subr.mxu0 0.0
        %238 = vmatpush1.msra.mxu0 0.0
        %239 = vmatprep.subr.mxu0 0.0
        %240 = vmatpush1.msra.mxu0 0.0
        %241 = vmatprep.subr.mxu0 0.0
        %242 = vmatpush1.msra.mxu0 0.0
        %243 = vmatprep.subr.mxu0 0.0
        %244 = vmatpush1.msra.mxu0 0.0
        %245 = vmatprep.subr.mxu0 0.0
        %246 = vmatpush1.msra.mxu0 0.0
        %247 = vmatprep.subr.mxu0 0.0
        %248 = vmatpush1.msra.mxu0 0.0
        %249 = vmatprep.subr.mxu0 0.0
        %250 = vmatpush1.msra.mxu0 0.0
        %251 = vmatprep.subr.mxu0 0.0
        %252 = vmatpush1.msra.mxu0 0.0
        %253 = vmatprep.subr.mxu0 0.0
        %254 = vmatpush1.msra.mxu0 0.0
        %255 = vmatprep.subr.mxu0 0.0
        %256 = vmatpush1.msra.mxu0 0.0
        %257 = vmatprep.subr.mxu0 0.0
        %258 = vmatpush1.msra.mxu0 0.0
        %259 = vmatprep.subr.mxu0 0.0
        %260 = vmatpush1.msra.mxu0 0.0
        %261 = vmatprep.subr.mxu0 0.0
        %262 = vmatpush1.msra.mxu0 0.0
        %263 = vmatprep.subr.mxu0 0.0
        %264 = vmatpush1.msra.mxu0 0.0
        %265 = vmatprep.subr.mxu0 0.0
        %266 = vmatpush1.msra.mxu0 0.0
        %267 = vmatprep.subr.mxu0 0.0
        %268 = vmatpush1.msra.mxu0 0.0
        %269 = vmatprep.subr.mxu0 0.0
        %270 = vmatpush1.msra.mxu0 0.0
        %271 = vmatprep.subr.mxu0 0.0
        %272 = vmatpush1.msra.mxu0 0.0
        %273 = vmatprep.subr.mxu0 0.0
        %274 = vmatpush1.msra.mxu0 0.0
        %275 = vmatprep.mubr.f32.mxu0 0.0
        %276 = vmatmul.mubr.f32.gmra.mrb[0].mxu0 %v167
        %v277 = vpop.f32.mrb[0].mxu0
        %v278 = vadd.f32 0.0, %v277
        %v279 = vpop.f32.mrb[0].mxu0
        %v280 = vadd.f32 0.0, %v279
        %281 = vmatprep.mubr.f32.mxu0 0.0
        %282 = vmatmul.mubr.f32.gmra.mrb[0].mxu0 %v170
        %v283 = vpop.f32.mrb[0].mxu0
        %v284 = vadd.f32 0.0, %v283
        %v285 = vpop.f32.mrb[0].mxu0
        %v286 = vadd.f32 0.0, %v285
        %287 = vmatprep.mubr.f32.mxu0 0.0
        %288 = vmatmul.mubr.f32.gmra.mrb[0].mxu0 %v173
        %v289 = vpop.f32.mrb[0].mxu0
        %v290 = vadd.f32 0.0, %v289
        %v291 = vpop.f32.mrb[0].mxu0
        %v292 = vadd.f32 0.0, %v291
        %293 = vmatprep.mubr.f32.mxu0 0.0
        %294 = vmatmul.mubr.f32.gmra.mrb[0].mxu0 %v176
        %v295 = vpop.f32.mrb[0].mxu0
        %v296 = vadd.f32 0.0, %v295
        %v297 = vpop.f32.mrb[0].mxu0
        %v298 = vadd.f32 0.0, %v297
        %299 = vmatprep.mubr.f32.mxu0 0.0
        %300 = vmatmul.mubr.f32.gmra.mrb[0].mxu0 %v179
        %v301 = vpop.f32.mrb[0].mxu0
        %v302 = vadd.f32 0.0, %v301
        %v303 = vpop.f32.mrb[0].mxu0
        %v304 = vadd.f32 0.0, %v303
        %305 = vmatprep.mubr.f32.mxu0 0.0
        %306 = vmatmul.mubr.f32.gmra.mrb[0].mxu0 %v182
        %v307 = vpop.f32.mrb[0].mxu0
        %v308 = vadd.f32 0.0, %v307
        %v309 = vpop.f32.mrb[0].mxu0
        %v310 = vadd.f32 0.0, %v309
        %311 = vmatprep.mubr.f32.mxu0 0.0
        %312 = vmatmul.mubr.f32.gmra.mrb[0].mxu0 %v185
        %v313 = vpop.f32.mrb[0].mxu0
        %v314 = vadd.f32 0.0, %v313
        %v315 = vpop.f32.mrb[0].mxu0
        %v316 = vadd.f32 0.0, %v315
        %317 = vmatprep.mubr.f32.mxu0 0.0
        %318 = vmatmul.mubr.f32.gmra.mrb[0].mxu0 %v188
        %v319 = vpop.f32.mrb[0].mxu0
        %v320 = vadd.f32 0.0, %v319
        %v321 = vpop.f32.mrb[0].mxu0
        %v322 = vadd.f32 0.0, %v321
        %323 = vmatprep.mubr.f32.mxu0 0.0
        %324 = vmatmul.mubr.f32.gmra.mrb[0].mxu0 %v191
        %v325 = vpop.f32.mrb[0].mxu0
        %v326 = vadd.f32 0.0, %v325
        %v327 = vpop.f32.mrb[0].mxu0
        %v328 = vadd.f32 0.0, %v327
        %329 = vmatprep.mubr.f32.mxu0 0.0
        %330 = vmatmul.mubr.f32.gmra.mrb[0].mxu0 %v194
        %v331 = vpop.f32.mrb[0].mxu0
        %v332 = vadd.f32 0.0, %v331
        %v333 = vpop.f32.mrb[0].mxu0
        %v334 = vadd.f32 0.0, %v333
        %335 = vmatprep.mubr.f32.mxu0 0.0
        %336 = vmatmul.mubr.f32.gmra.mrb[0].mxu0 %v197
        %v337 = vpop.f32.mrb[0].mxu0
        %v338 = vadd.f32 0.0, %v337
        %v339 = vpop.f32.mrb[0].mxu0
        %v340 = vadd.f32 0.0, %v339
        %341 = vmatprep.mubr.f32.mxu0 0.0
        %342 = vmatmul.mubr.f32.gmra.mrb[0].mxu0 %v200
        %v343 = vpop.f32.mrb[0].mxu0
        %v344 = vadd.f32 0.0, %v343
        %v345 = vpop.f32.mrb[0].mxu0
        %v346 = vadd.f32 0.0, %v345
        %347 = vmatprep.mubr.f32.mxu0 0.0
        %348 = vmatmul.mubr.f32.gmra.mrb[0].mxu0 %v203
        %v349 = vpop.f32.mrb[0].mxu0
        %v350 = vadd.f32 0.0, %v349
        %v351 = vpop.f32.mrb[0].mxu0
        %v352 = vadd.f32 0.0, %v351
        %353 = vmatprep.mubr.f32.mxu0 0.0
        %354 = vmatmul.mubr.f32.gmra.mrb[0].mxu0 %v206
        %v355 = vpop.f32.mrb[0].mxu0
        %v356 = vadd.f32 0.0, %v355
        %v357 = vpop.f32.mrb[0].mxu0
        %v358 = vadd.f32 0.0, %v357
        %359 = vmatprep.mubr.f32.mxu0 0.0
        %360 = vmatmul.mubr.f32.gmra.mrb[0].mxu0 %v209
        %v361 = vpop.f32.mrb[0].mxu0
        %v362 = vadd.f32 0.0, %v361
        %v363 = vpop.f32.mrb[0].mxu0
        %v364 = vadd.f32 0.0, %v363
        %365 = vdwg.mxu0
        %366 = vmatprep.subr.mxu0 %v160
        %367 = vmatpush1.msra.mxu0 %v159
        %368 = vmatprep.subr.mxu0 %v164
        %369 = vmatpush1.msra.mxu0 %v163
        %370 = vmatprep.subr.mxu0 0.0
        %371 = vmatpush1.msra.mxu0 0.0
        %372 = vmatprep.subr.mxu0 0.0
        %373 = vmatpush1.msra.mxu0 0.0
        %374 = vmatprep.subr.mxu0 0.0
        %375 = vmatpush1.msra.mxu0 0.0
        %376 = vmatprep.subr.mxu0 0.0
        %377 = vmatpush1.msra.mxu0 0.0
        %378 = vmatprep.subr.mxu0 0.0
        %379 = vmatpush1.msra.mxu0 0.0
        %380 = vmatprep.subr.mxu0 0.0
        %381 = vmatpush1.msra.mxu0 0.0
        %382 = vmatprep.subr.mxu0 0.0
        %383 = vmatpush1.msra.mxu0 0.0
        %384 = vmatprep.subr.mxu0 0.0
        %385 = vmatpush1.msra.mxu0 0.0
        %386 = vmatprep.subr.mxu0 0.0
        %387 = vmatpush1.msra.mxu0 0.0
        %388 = vmatprep.subr.mxu0 0.0
        %389 = vmatpush1.msra.mxu0 0.0
        %390 = vmatprep.subr.mxu0 0.0
        %391 = vmatpush1.msra.mxu0 0.0
        %392 = vmatprep.subr.mxu0 0.0
        %393 = vmatpush1.msra.mxu0 0.0
        %394 = vmatprep.subr.mxu0 0.0
        %395 = vmatpush1.msra.mxu0 0.0
        %396 = vmatprep.subr.mxu0 0.0
        %397 = vmatpush1.msra.mxu0 0.0
        %398 = vmatprep.subr.mxu0 0.0
        %399 = vmatpush1.msra.mxu0 0.0
        %400 = vmatprep.subr.mxu0 0.0
        %401 = vmatpush1.msra.mxu0 0.0
        %402 = vmatprep.subr.mxu0 0.0
        %403 = vmatpush1.msra.mxu0 0.0
        %404 = vmatprep.subr.mxu0 0.0
        %405 = vmatpush1.msra.mxu0 0.0
        %406 = vmatprep.subr.mxu0 0.0
        %407 = vmatpush1.msra.mxu0 0.0
        %408 = vmatprep.subr.mxu0 0.0
        %409 = vmatpush1.msra.mxu0 0.0
        %410 = vmatprep.subr.mxu0 0.0
        %411 = vmatpush1.msra.mxu0 0.0
        %412 = vmatprep.subr.mxu0 0.0
        %413 = vmatpush1.msra.mxu0 0.0
        %414 = vmatprep.subr.mxu0 0.0
        %415 = vmatpush1.msra.mxu0 0.0
        %416 = vmatprep.subr.mxu0 0.0
        %417 = vmatpush1.msra.mxu0 0.0
        %418 = vmatprep.subr.mxu0 0.0
        %419 = vmatpush1.msra.mxu0 0.0
        %420 = vmatprep.subr.mxu0 0.0
        %421 = vmatpush1.msra.mxu0 0.0
        %422 = vmatprep.subr.mxu0 0.0
        %423 = vmatpush1.msra.mxu0 0.0
        %424 = vmatprep.subr.mxu0 0.0
        %425 = vmatpush1.msra.mxu0 0.0
        %426 = vmatprep.subr.mxu0 0.0
        %427 = vmatpush1.msra.mxu0 0.0
        %428 = vmatprep.subr.mxu0 0.0
        %429 = vmatpush1.msra.mxu0 0.0
        %430 = vmatprep.mubr.f32.mxu0 0.0
        %431 = vmatmul.mubr.f32.gmra.mrb[0].mxu0 %v167
        %v432 = vpop.f32.mrb[0].mxu0
        %v433 = vadd.f32 0.0, %v432
        %v434 = vpop.f32.mrb[0].mxu0
        %v435 = vadd.f32 0.0, %v434
        %436 = vmatprep.mubr.f32.mxu0 0.0
        %437 = vmatmul.mubr.f32.gmra.mrb[0].mxu0 %v170
        %v438 = vpop.f32.mrb[0].mxu0
        %v439 = vadd.f32 0.0, %v438
        %v440 = vpop.f32.mrb[0].mxu0
        %v441 = vadd.f32 0.0, %v440
        %442 = vmatprep.mubr.f32.mxu0 0.0
        %443 = vmatmul.mubr.f32.gmra.mrb[0].mxu0 %v173
        %v444 = vpop.f32.mrb[0].mxu0
        %v445 = vadd.f32 0.0, %v444
        %v446 = vpop.f32.mrb[0].mxu0
        %v447 = vadd.f32 0.0, %v446
        %448 = vmatprep.mubr.f32.mxu0 0.0
        %449 = vmatmul.mubr.f32.gmra.mrb[0].mxu0 %v176
        %v450 = vpop.f32.mrb[0].mxu0
        %v451 = vadd.f32 0.0, %v450
        %v452 = vpop.f32.mrb[0].mxu0
        %v453 = vadd.f32 0.0, %v452
        %454 = vmatprep.mubr.f32.mxu0 0.0
        %455 = vmatmul.mubr.f32.gmra.mrb[0].mxu0 %v179
        %v456 = vpop.f32.mrb[0].mxu0
        %v457 = vadd.f32 0.0, %v456
        %v458 = vpop.f32.mrb[0].mxu0
        %v459 = vadd.f32 0.0, %v458
        %460 = vmatprep.mubr.f32.mxu0 0.0
        %461 = vmatmul.mubr.f32.gmra.mrb[0].mxu0 %v182
        %v462 = vpop.f32.mrb[0].mxu0
        %v463 = vadd.f32 0.0, %v462
        %v464 = vpop.f32.mrb[0].mxu0
        %v465 = vadd.f32 0.0, %v464
        %466 = vmatprep.mubr.f32.mxu0 0.0
        %467 = vmatmul.mubr.f32.gmra.mrb[0].mxu0 %v185
        %v468 = vpop.f32.mrb[0].mxu0
        %v469 = vadd.f32 0.0, %v468
        %v470 = vpop.f32.mrb[0].mxu0
        %v471 = vadd.f32 0.0, %v470
        %472 = vmatprep.mubr.f32.mxu0 0.0
        %473 = vmatmul.mubr.f32.gmra.mrb[0].mxu0 %v188
        %v474 = vpop.f32.mrb[0].mxu0
        %v475 = vadd.f32 0.0, %v474
        %v476 = vpop.f32.mrb[0].mxu0
        %v477 = vadd.f32 0.0, %v476
        %478 = vmatprep.mubr.f32.mxu0 0.0
        %479 = vmatmul.mubr.f32.gmra.mrb[0].mxu0 %v191
        %v480 = vpop.f32.mrb[0].mxu0
        %v481 = vadd.f32 0.0, %v480
        %v482 = vpop.f32.mrb[0].mxu0
        %v483 = vadd.f32 0.0, %v482
        %484 = vmatprep.mubr.f32.mxu0 0.0
        %485 = vmatmul.mubr.f32.gmra.mrb[0].mxu0 %v194
        %v486 = vpop.f32.mrb[0].mxu0
        %v487 = vadd.f32 0.0, %v486
        %v488 = vpop.f32.mrb[0].mxu0
        %v489 = vadd.f32 0.0, %v488
        %490 = vmatprep.mubr.f32.mxu0 0.0
        %491 = vmatmul.mubr.f32.gmra.mrb[0].mxu0 %v197
        %v492 = vpop.f32.mrb[0].mxu0
        %v493 = vadd.f32 0.0, %v492
        %v494 = vpop.f32.mrb[0].mxu0
        %v495 = vadd.f32 0.0, %v494
        %496 = vmatprep.mubr.f32.mxu0 0.0
        %497 = vmatmul.mubr.f32.gmra.mrb[0].mxu0 %v200
        %v498 = vpop.f32.mrb[0].mxu0
        %v499 = vadd.f32 0.0, %v498
        %v500 = vpop.f32.mrb[0].mxu0
        %v501 = vadd.f32 0.0, %v500
        %502 = vmatprep.mubr.f32.mxu0 0.0
        %503 = vmatmul.mubr.f32.gmra.mrb[0].mxu0 %v203
        %v504 = vpop.f32.mrb[0].mxu0
        %v505 = vadd.f32 0.0, %v504
        %v506 = vpop.f32.mrb[0].mxu0
        %v507 = vadd.f32 0.0, %v506
        %508 = vmatprep.mubr.f32.mxu0 0.0
        %509 = vmatmul.mubr.f32.gmra.mrb[0].mxu0 %v206
        %v510 = vpop.f32.mrb[0].mxu0
        %v511 = vadd.f32 0.0, %v510
        %v512 = vpop.f32.mrb[0].mxu0
        %v513 = vadd.f32 0.0, %v512
        %514 = vmatprep.mubr.f32.mxu0 0.0
        %515 = vmatmul.mubr.f32.gmra.mrb[0].mxu0 %v209
        %v516 = vpop.f32.mrb[0].mxu0
        %v517 = vadd.f32 0.0, %v516
        %v518 = vpop.f32.mrb[0].mxu0
        %v519 = vadd.f32 0.0, %v518
        %520 = vdwg.mxu0
        %521 = vst [vmem:[#allocation2] sm:$0xff] %v278
        %522 = vst [vmem:[#allocation2 + $0x8] sm:$0xff] %v280
        %523 = vst [vmem:[#allocation2 + $0x10] sm:$0xff] %v433
        %524 = vst [vmem:[#allocation2 + $0x18] sm:$0xff] %v435
        %525 = vst [vmem:[#allocation2 + $0x20] sm:$0xff] %v284
        %526 = vst [vmem:[#allocation2 + $0x28] sm:$0xff] %v286
        %527 = vst [vmem:[#allocation2 + $0x30] sm:$0xff] %v439
        %528 = vst [vmem:[#allocation2 + $0x38] sm:$0xff] %v441
        %529 = vst [vmem:[#allocation2 + $0x40] sm:$0xff] %v290
        %530 = vst [vmem:[#allocation2 + $0x48] sm:$0xff] %v292
        %531 = vst [vmem:[#allocation2 + $0x50] sm:$0xff] %v445
        %532 = vst [vmem:[#allocation2 + $0x58] sm:$0xff] %v447
        %533 = vst [vmem:[#allocation2 + $0x60] sm:$0xff] %v296
        %534 = vst [vmem:[#allocation2 + $0x68] sm:$0xff] %v298
        %535 = vst [vmem:[#allocation2 + $0x70] sm:$0xff] %v451
        %536 = vst [vmem:[#allocation2 + $0x78] sm:$0xff] %v453
        %537 = vst [vmem:[#allocation2 + $0x80] sm:$0xff] %v302
        %538 = vst [vmem:[#allocation2 + $0x88] sm:$0xff] %v304
        %539 = vst [vmem:[#allocation2 + $0x90] sm:$0xff] %v457
        %540 = vst [vmem:[#allocation2 + $0x98] sm:$0xff] %v459
        %541 = vst [vmem:[#allocation2 + $0xa0] sm:$0xff] %v308
        %542 = vst [vmem:[#allocation2 + $0xa8] sm:$0xff] %v310
        %543 = vst [vmem:[#allocation2 + $0xb0] sm:$0xff] %v463
        %544 = vst [vmem:[#allocation2 + $0xb8] sm:$0xff] %v465
        %545 = vst [vmem:[#allocation2 + $0xc0] sm:$0xff] %v314
        %546 = vst [vmem:[#allocation2 + $0xc8] sm:$0xff] %v316
        %547 = vst [vmem:[#allocation2 + $0xd0] sm:$0xff] %v469
        %548 = vst [vmem:[#allocation2 + $0xd8] sm:$0xff] %v471
        %549 = vst [vmem:[#allocation2 + $0xe0] sm:$0xff] %v320
        %550 = vst [vmem:[#allocation2 + $0xe8] sm:$0xff] %v322
        %551 = vst [vmem:[#allocation2 + $0xf0] sm:$0xff] %v475
        %552 = vst [vmem:[#allocation2 + $0xf8] sm:$0xff] %v477
        %553 = vst [vmem:[#allocation2 + $0x100] sm:$0xff] %v326
        %554 = vst [vmem:[#allocation2 + $0x108] sm:$0xff] %v328
        %555 = vst [vmem:[#allocation2 + $0x110] sm:$0xff] %v481
        %556 = vst [vmem:[#allocation2 + $0x118] sm:$0xff] %v483
        %557 = vst [vmem:[#allocation2 + $0x120] sm:$0xff] %v332
        %558 = vst [vmem:[#allocation2 + $0x128] sm:$0xff] %v334
        %559 = vst [vmem:[#allocation2 + $0x130] sm:$0xff] %v487
        %560 = vst [vmem:[#allocation2 + $0x138] sm:$0xff] %v489
        %561 = vst [vmem:[#allocation2 + $0x140] sm:$0xff] %v338
        %562 = vst [vmem:[#allocation2 + $0x148] sm:$0xff] %v340
        %563 = vst [vmem:[#allocation2 + $0x150] sm:$0xff] %v493
        %564 = vst [vmem:[#allocation2 + $0x158] sm:$0xff] %v495
        %565 = vst [vmem:[#allocation2 + $0x160] sm:$0xff] %v344
        %566 = vst [vmem:[#allocation2 + $0x168] sm:$0xff] %v346
        %567 = vst [vmem:[#allocation2 + $0x170] sm:$0xff] %v499
        %568 = vst [vmem:[#allocation2 + $0x178] sm:$0xff] %v501
        %569 = vst [vmem:[#allocation2 + $0x180] sm:$0xff] %v350
        %570 = vst [vmem:[#allocation2 + $0x188] sm:$0xff] %v352
        %571 = vst [vmem:[#allocation2 + $0x190] sm:$0xff] %v505
        %572 = vst [vmem:[#allocation2 + $0x198] sm:$0xff] %v507
        %573 = vst [vmem:[#allocation2 + $0x1a0] sm:$0xff] %v356
        %574 = vst [vmem:[#allocation2 + $0x1a8] sm:$0xff] %v358
        %575 = vst [vmem:[#allocation2 + $0x1b0] sm:$0xff] %v511
        %576 = vst [vmem:[#allocation2 + $0x1b8] sm:$0xff] %v513
        %577 = vst [vmem:[#allocation2 + $0x1c0] sm:$0xff] %v362
        %578 = vst [vmem:[#allocation2 + $0x1c8] sm:$0xff] %v364
        %579 = vst [vmem:[#allocation2 + $0x1d0] sm:$0xff] %v517
        %580 = vst [vmem:[#allocation2 + $0x1d8] sm:$0xff] %v519
        %v581 = vld [vmem:[#allocation2 + $0x80] sm:$0xff]
        %v582 = vld [vmem:[#allocation2 + $0x88] sm:$0xff]
        %v583 = vld [vmem:[#allocation2 + $0x90] sm:$0xff]
        %v584 = vld [vmem:[#allocation2 + $0x98] sm:$0xff]
        %v585 = vld [vmem:[#allocation2 + $0xa0] sm:$0xff]
        %v586 = vld [vmem:[#allocation2 + $0xa8] sm:$0xff]
        %v587 = vld [vmem:[#allocation2 + $0xb0] sm:$0xff]
        %v588 = vld [vmem:[#allocation2 + $0xb8] sm:$0xff]
        %v589 = vld [vmem:[#allocation2] sm:$0xff]
        %v590 = vld [vmem:[#allocation2 + $0x8] sm:$0xff]
        %v591 = vld [vmem:[#allocation2 + $0x10] sm:$0xff]
        %v592 = vld [vmem:[#allocation2 + $0x20] sm:$0xff]
        %v593 = vld [vmem:[#allocation2 + $0x28] sm:$0xff]
        %v594 = vld [vmem:[#allocation2 + $0x30] sm:$0xff]
        %v595 = vld [vmem:[#allocation2 + $0xc0] sm:$0xff]
        %v596 = vld [vmem:[#allocation2 + $0xc8] sm:$0xff]
        %v597 = vld [vmem:[#allocation2 + $0xd0] sm:$0xff]
        %v598 = vld [vmem:[#allocation2 + $0xd8] sm:$0xff]
        %602 = vrot.lane.b32.xlu0 %v589, 19
        %v603 = vpop.permute.xlu0 %602
        %604 = vrot.lane.b32.xlu0 %v590, 19
        %v605 = vpop.permute.xlu0 %604
        %606 = vrot.lane.b32.xlu0 %v591, 19
        %v607 = vpop.permute.xlu0 %606
        %vm608 = vcmask 154624
        %v609 = vsel %vm608, %v603, %v605
        %v610 = vsel %vm608, %v605, %v607
        %v615 = vmul.f32 %v581, %v603
        %v616 = vmul.f32 %v582, %v609
        %v617 = vmul.f32 %v583, %v610
        %v618 = vmul.f32 %v584, %v607
        %v619 = vadd.f32 %v595, %v615
        %v620 = vadd.f32 %v596, %v616
        %v621 = vadd.f32 %v597, %v617
        %v622 = vadd.f32 %v598, %v618
        %626 = vrot.lane.b32.xlu0 %v592, 19
        %v627 = vpop.permute.xlu0 %626
        %628 = vrot.lane.b32.xlu0 %v593, 19
        %v629 = vpop.permute.xlu0 %628
        %630 = vrot.lane.b32.xlu0 %v594, 19
        %v631 = vpop.permute.xlu0 %630
        %v632 = vsel %vm608, %v627, %v629
        %v633 = vsel %vm608, %v629, %v631
        %v638 = vmul.f32 %v585, %v627
        %v639 = vmul.f32 %v586, %v632
        %v640 = vmul.f32 %v587, %v633
        %v641 = vmul.f32 %v588, %v631
        %v642 = vadd.f32 %v619, %v638
        %v643 = vadd.f32 %v620, %v639
        %v644 = vadd.f32 %v621, %v640
        %v645 = vadd.f32 %v622, %v641
        %650 = vrot.lane.b32.xlu0 %v642, 109
        %v651 = vpop.permute.xlu0 %650
        %652 = vrot.lane.b32.xlu0 %v643, 109
        %v653 = vpop.permute.xlu0 %652
        %654 = vrot.lane.b32.xlu0 %v644, 109
        %v655 = vpop.permute.xlu0 %654
        %656 = vrot.lane.b32.xlu0 %v645, 109
        %v657 = vpop.permute.xlu0 %656
        %vm658 = vcmask 891904
        %v659 = vsel %vm658, %v651, %v653
        %v660 = vsel %vm658, %v653, %v655
        %v661 = vsel %vm658, %v655, %v657
        %665 = vst [vmem:[#allocation3] sm:$0xff] %v659
        %666 = vst [vmem:[#allocation3 + $0x8] sm:$0xff] %v660
        %667 = vst [vmem:[#allocation3 + $0x10] sm:$0xff] %v661
        %v668 = vld [vmem:[#allocation2] sm:$0xff]
        %v669 = vld [vmem:[#allocation2 + $0x8] sm:$0xff]
        %v670 = vld [vmem:[#allocation2 + $0x10] sm:$0xff]
        %v671 = vld [vmem:[#allocation2 + $0x18] sm:$0xff]
        %v672 = vld [vmem:[#allocation2 + $0x20] sm:$0xff]
        %v673 = vld [vmem:[#allocation2 + $0x28] sm:$0xff]
        %v674 = vld [vmem:[#allocation2 + $0x30] sm:$0xff]
        %v675 = vld [vmem:[#allocation2 + $0x38] sm:$0xff]
        %v676 = vld [vmem:[#allocation2 + $0xe0] sm:$0xff]
        %v677 = vld [vmem:[#allocation2 + $0xe8] sm:$0xff]
        %v678 = vld [vmem:[#allocation2 + $0xf0] sm:$0xff]
        %v679 = vld [vmem:[#allocation2 + $0xf8] sm:$0xff]
        %684 = vrot.lane.b32.xlu0 %v668, 18
        %v685 = vpop.permute.xlu0 %684
        %686 = vrot.lane.b32.xlu0 %v669, 18
        %v687 = vpop.permute.xlu0 %686
        %688 = vrot.lane.b32.xlu0 %v670, 18
        %v689 = vpop.permute.xlu0 %688
        %690 = vrot.lane.b32.xlu0 %v671, 18
        %v691 = vpop.permute.xlu0 %690
        %vm692 = vcmask 146432
        %v693 = vsel %vm692, %v685, %v687
        %v694 = vsel %vm692, %v687, %v689
        %v695 = vsel %vm692, %v689, %v691
        %v700 = vmul.f32 %v581, %v685
        %v701 = vmul.f32 %v582, %v693
        %v702 = vmul.f32 %v583, %v694
        %v703 = vmul.f32 %v584, %v695
        %v704 = vadd.f32 %v676, %v700
        %v705 = vadd.f32 %v677, %v701
        %v706 = vadd.f32 %v678, %v702
        %v707 = vadd.f32 %v679, %v703
        %712 = vrot.lane.b32.xlu0 %v672, 18
        %v713 = vpop.permute.xlu0 %712
        %714 = vrot.lane.b32.xlu0 %v673, 18
        %v715 = vpop.permute.xlu0 %714
        %716 = vrot.lane.b32.xlu0 %v674, 18
        %v717 = vpop.permute.xlu0 %716
        %718 = vrot.lane.b32.xlu0 %v675, 18
        %v719 = vpop.permute.xlu0 %718
        %v720 = vsel %vm692, %v713, %v715
        %v721 = vsel %vm692, %v715, %v717
        %v722 = vsel %vm692, %v717, %v719
        %v727 = vmul.f32 %v585, %v713
        %v728 = vmul.f32 %v586, %v720
        %v729 = vmul.f32 %v587, %v721
        %v730 = vmul.f32 %v588, %v722
        %v731 = vadd.f32 %v704, %v727
        %v732 = vadd.f32 %v705, %v728
        %v733 = vadd.f32 %v706, %v729
        %v734 = vadd.f32 %v707, %v730
        %739 = vrot.lane.b32.xlu0 %v731, 109
        %v740 = vpop.permute.xlu0 %739
        %741 = vrot.lane.b32.xlu0 %v732, 109
        %v742 = vpop.permute.xlu0 %741
        %743 = vrot.lane.b32.xlu0 %v733, 109
        %v744 = vpop.permute.xlu0 %743
        %745 = vrot.lane.b32.xlu0 %v734, 109
        %v746 = vpop.permute.xlu0 %745
        %v747 = vsel %vm658, %v740, %v742
        %v748 = vsel %vm658, %v742, %v744
        %v749 = vsel %vm658, %v744, %v746
        %753 = vst [vmem:[#allocation3 + $0x18] sm:$0xff] %v747
        %754 = vst [vmem:[#allocation3 + $0x20] sm:$0xff] %v748
        %755 = vst [vmem:[#allocation3 + $0x28] sm:$0xff] %v749
        %v756 = vmax.f32 %v642, %v731
        %v757 = vmax.f32 %v643, %v732
        %v758 = vmax.f32 %v644, %v733
        %v759 = vmax.f32 %v645, %v734
        %v760 = vld [vmem:[#allocation2] sm:$0xff]
        %v761 = vld [vmem:[#allocation2 + $0x8] sm:$0xff]
        %v762 = vld [vmem:[#allocation2 + $0x10] sm:$0xff]
        %v763 = vld [vmem:[#allocation2 + $0x18] sm:$0xff]
        %v764 = vld [vmem:[#allocation2 + $0x20] sm:$0xff]
        %v765 = vld [vmem:[#allocation2 + $0x28] sm:$0xff]
        %v766 = vld [vmem:[#allocation2 + $0x30] sm:$0xff]
        %v767 = vld [vmem:[#allocation2 + $0x38] sm:$0xff]
        %v768 = vld [vmem:[#allocation2 + $0x100] sm:$0xff]
        %v769 = vld [vmem:[#allocation2 + $0x108] sm:$0xff]
        %v770 = vld [vmem:[#allocation2 + $0x110] sm:$0xff]
        %v771 = vld [vmem:[#allocation2 + $0x118] sm:$0xff]
        %776 = vrot.lane.b32.xlu0 %v760, 17
        %v777 = vpop.permute.xlu0 %776
        %778 = vrot.lane.b32.xlu0 %v761, 17
        %v779 = vpop.permute.xlu0 %778
        %780 = vrot.lane.b32.xlu0 %v762, 17
        %v781 = vpop.permute.xlu0 %780
        %782 = vrot.lane.b32.xlu0 %v763, 17
        %v783 = vpop.permute.xlu0 %782
        %vm784 = vcmask 138240
        %v785 = vsel %vm784, %v777, %v779
        %v786 = vsel %vm784, %v779, %v781
        %v787 = vsel %vm784, %v781, %v783
        %v792 = vmul.f32 %v581, %v777
        %v793 = vmul.f32 %v582, %v785
        %v794 = vmul.f32 %v583, %v786
        %v795 = vmul.f32 %v584, %v787
        %v796 = vadd.f32 %v768, %v792
        %v797 = vadd.f32 %v769, %v793
        %v798 = vadd.f32 %v770, %v794
        %v799 = vadd.f32 %v771, %v795
        %804 = vrot.lane.b32.xlu0 %v764, 17
        %v805 = vpop.permute.xlu0 %804
        %806 = vrot.lane.b32.xlu0 %v765, 17
        %v807 = vpop.permute.xlu0 %806
        %808 = vrot.lane.b32.xlu0 %v766, 17
        %v809 = vpop.permute.xlu0 %808
        %810 = vrot.lane.b32.xlu0 %v767, 17
        %v811 = vpop.permute.xlu0 %810
        %v812 = vsel %vm784, %v805, %v807
        %v813 = vsel %vm784, %v807, %v809
        %v814 = vsel %vm784, %v809, %v811
        %v819 = vmul.f32 %v585, %v805
        %v820 = vmul.f32 %v586, %v812
        %v821 = vmul.f32 %v587, %v813
        %v822 = vmul.f32 %v588, %v814
        %v823 = vadd.f32 %v796, %v819
        %v824 = vadd.f32 %v797, %v820
        %v825 = vadd.f32 %v798, %v821
        %v826 = vadd.f32 %v799, %v822
        %831 = vrot.lane.b32.xlu0 %v823, 109
        %v832 = vpop.permute.xlu0 %831
        %833 = vrot.lane.b32.xlu0 %v824, 109
        %v834 = vpop.permute.xlu0 %833
        %835 = vrot.lane.b32.xlu0 %v825, 109
        %v836 = vpop.permute.xlu0 %835
        %837 = vrot.lane.b32.xlu0 %v826, 109
        %v838 = vpop.permute.xlu0 %837
        %v839 = vsel %vm658, %v832, %v834
        %v840 = vsel %vm658, %v834, %v836
        %v841 = vsel %vm658, %v836, %v838
        %845 = vst [vmem:[#allocation3 + $0x30] sm:$0xff] %v839
        %846 = vst [vmem:[#allocation3 + $0x38] sm:$0xff] %v840
        %847 = vst [vmem:[#allocation3 + $0x40] sm:$0xff] %v841
        %v848 = vmax.f32 %v756, %v823
        %v849 = vmax.f32 %v757, %v824
        %v850 = vmax.f32 %v758, %v825
        %v851 = vmax.f32 %v759, %v826
        %v852 = vld [vmem:[#allocation2] sm:$0xff]
        %v853 = vld [vmem:[#allocation2 + $0x8] sm:$0xff]
        %v854 = vld [vmem:[#allocation2 + $0x10] sm:$0xff]
        %v855 = vld [vmem:[#allocation2 + $0x18] sm:$0xff]
        %v856 = vld [vmem:[#allocation2 + $0x20] sm:$0xff]
        %v857 = vld [vmem:[#allocation2 + $0x28] sm:$0xff]
        %v858 = vld [vmem:[#allocation2 + $0x30] sm:$0xff]
        %v859 = vld [vmem:[#allocation2 + $0x38] sm:$0xff]
        %v860 = vld [vmem:[#allocation2 + $0x120] sm:$0xff]
        %v861 = vld [vmem:[#allocation2 + $0x128] sm:$0xff]
        %v862 = vld [vmem:[#allocation2 + $0x130] sm:$0xff]
        %v863 = vld [vmem:[#allocation2 + $0x138] sm:$0xff]
        %868 = vrot.lane.b32.xlu0 %v852, 1
        %v869 = vpop.permute.xlu0 %868
        %870 = vrot.lane.b32.xlu0 %v853, 1
        %v871 = vpop.permute.xlu0 %870
        %872 = vrot.lane.b32.xlu0 %v854, 1
        %v873 = vpop.permute.xlu0 %872
        %874 = vrot.lane.b32.xlu0 %v855, 1
        %v875 = vpop.permute.xlu0 %874
        %vm876 = vcmask 7168
        %v877 = vsel %vm876, %v869, %v871
        %v878 = vsel %vm876, %v871, %v873
        %v879 = vsel %vm876, %v873, %v875
        %v884 = vmul.f32 %v581, %v869
        %v885 = vmul.f32 %v582, %v877
        %v886 = vmul.f32 %v583, %v878
        %v887 = vmul.f32 %v584, %v879
        %v888 = vadd.f32 %v860, %v884
        %v889 = vadd.f32 %v861, %v885
        %v890 = vadd.f32 %v862, %v886
        %v891 = vadd.f32 %v863, %v887
        %896 = vrot.lane.b32.xlu0 %v856, 1
        %v897 = vpop.permute.xlu0 %896
        %898 = vrot.lane.b32.xlu0 %v857, 1
        %v899 = vpop.permute.xlu0 %898
        %900 = vrot.lane.b32.xlu0 %v858, 1
        %v901 = vpop.permute.xlu0 %900
        %902 = vrot.lane.b32.xlu0 %v859, 1
        %v903 = vpop.permute.xlu0 %902
        %v904 = vsel %vm876, %v897, %v899
        %v905 = vsel %vm876, %v899, %v901
        %v906 = vsel %vm876, %v901, %v903
        %v911 = vmul.f32 %v585, %v897
        %v912 = vmul.f32 %v586, %v904
        %v913 = vmul.f32 %v587, %v905
        %v914 = vmul.f32 %v588, %v906
        %v915 = vadd.f32 %v888, %v911
        %v916 = vadd.f32 %v889, %v912
        %v917 = vadd.f32 %v890, %v913
        %v918 = vadd.f32 %v891, %v914
        %923 = vrot.lane.b32.xlu0 %v915, 109
        %v924 = vpop.permute.xlu0 %923
        %925 = vrot.lane.b32.xlu0 %v916, 109
        %v926 = vpop.permute.xlu0 %925
        %927 = vrot.lane.b32.xlu0 %v917, 109
        %v928 = vpop.permute.xlu0 %927
        %929 = vrot.lane.b32.xlu0 %v918, 109
        %v930 = vpop.permute.xlu0 %929
        %v931 = vsel %vm658, %v924, %v926
        %v932 = vsel %vm658, %v926, %v928
        %v933 = vsel %vm658, %v928, %v930
        %937 = vst [vmem:[#allocation3 + $0x48] sm:$0xff] %v931
        %938 = vst [vmem:[#allocation3 + $0x50] sm:$0xff] %v932
        %939 = vst [vmem:[#allocation3 + $0x58] sm:$0xff] %v933
        %v940 = vmax.f32 %v848, %v915
        %v941 = vmax.f32 %v849, %v916
        %v942 = vmax.f32 %v850, %v917
        %v943 = vmax.f32 %v851, %v918
        %v944 = vld [vmem:[#allocation2] sm:$0xff]
        %v945 = vld [vmem:[#allocation2 + $0x8] sm:$0xff]
        %v946 = vld [vmem:[#allocation2 + $0x10] sm:$0xff]
        %v947 = vld [vmem:[#allocation2 + $0x18] sm:$0xff]
        %v948 = vld [vmem:[#allocation2 + $0x20] sm:$0xff]
        %v949 = vld [vmem:[#allocation2 + $0x28] sm:$0xff]
        %v950 = vld [vmem:[#allocation2 + $0x30] sm:$0xff]
        %v951 = vld [vmem:[#allocation2 + $0x38] sm:$0xff]
        %v952 = vld [vmem:[#allocation2 + $0x140] sm:$0xff]
        %v953 = vld [vmem:[#allocation2 + $0x148] sm:$0xff]
        %v954 = vld [vmem:[#allocation2 + $0x150] sm:$0xff]
        %v955 = vld [vmem:[#allocation2 + $0x158] sm:$0xff]
        %v956 = vmul.f32 %v581, %v944
        %v957 = vmul.f32 %v582, %v945
        %v958 = vmul.f32 %v583, %v946
        %v959 = vmul.f32 %v584, %v947
        %v960 = vadd.f32 %v952, %v956
        %v961 = vadd.f32 %v953, %v957
        %v962 = vadd.f32 %v954, %v958
        %v963 = vadd.f32 %v955, %v959
        %v964 = vmul.f32 %v585, %v948
        %v965 = vmul.f32 %v586, %v949
        %v966 = vmul.f32 %v587, %v950
        %v967 = vmul.f32 %v588, %v951
        %v968 = vadd.f32 %v960, %v964
        %v969 = vadd.f32 %v961, %v965
        %v970 = vadd.f32 %v962, %v966
        %v971 = vadd.f32 %v963, %v967
        %976 = vrot.lane.b32.xlu0 %v968, 109
        %v977 = vpop.permute.xlu0 %976
        %978 = vrot.lane.b32.xlu0 %v969, 109
        %v979 = vpop.permute.xlu0 %978
        %980 = vrot.lane.b32.xlu0 %v970, 109
        %v981 = vpop.permute.xlu0 %980
        %982 = vrot.lane.b32.xlu0 %v971, 109
        %v983 = vpop.permute.xlu0 %982
        %v984 = vsel %vm658, %v977, %v979
        %v985 = vsel %vm658, %v979, %v981
        %v986 = vsel %vm658, %v981, %v983
        %990 = vst [vmem:[#allocation3 + $0x60] sm:$0xff] %v984
        %991 = vst [vmem:[#allocation3 + $0x68] sm:$0xff] %v985
        %992 = vst [vmem:[#allocation3 + $0x70] sm:$0xff] %v986
        %v993 = vmax.f32 %v940, %v968
        %v994 = vmax.f32 %v941, %v969
        %v995 = vmax.f32 %v942, %v970
        %v996 = vmax.f32 %v943, %v971
        %v997 = vld [vmem:[#allocation2] sm:$0xff]
        %v998 = vld [vmem:[#allocation2 + $0x8] sm:$0xff]
        %v999 = vld [vmem:[#allocation2 + $0x10] sm:$0xff]
        %v1000 = vld [vmem:[#allocation2 + $0x18] sm:$0xff]
        %v1001 = vld [vmem:[#allocation2 + $0x20] sm:$0xff]
        %v1002 = vld [vmem:[#allocation2 + $0x28] sm:$0xff]
        %v1003 = vld [vmem:[#allocation2 + $0x30] sm:$0xff]
        %v1004 = vld [vmem:[#allocation2 + $0x38] sm:$0xff]
        %v1005 = vld [vmem:[#allocation2 + $0x160] sm:$0xff]
        %v1006 = vld [vmem:[#allocation2 + $0x168] sm:$0xff]
        %v1007 = vld [vmem:[#allocation2 + $0x170] sm:$0xff]
        %v1008 = vld [vmem:[#allocation2 + $0x178] sm:$0xff]
        %1013 = vrot.lane.b32.xlu0 %v997, 127
        %v1014 = vpop.permute.xlu0 %1013
        %1015 = vrot.lane.b32.xlu0 %v998, 127
        %v1016 = vpop.permute.xlu0 %1015
        %1017 = vrot.lane.b32.xlu0 %v999, 127
        %v1018 = vpop.permute.xlu0 %1017
        %1019 = vrot.lane.b32.xlu0 %v1000, 127
        %v1020 = vpop.permute.xlu0 %1019
        %vm1021 = vcmask 1039360
        %v1022 = vsel %vm1021, %v1014, %v1016
        %v1023 = vsel %vm1021, %v1016, %v1018
        %v1024 = vsel %vm1021, %v1018, %v1020
        %v1029 = vmul.f32 %v581, %v1022
        %v1030 = vmul.f32 %v582, %v1023
        %v1031 = vmul.f32 %v583, %v1024
        %v1032 = vmul.f32 %v584, %v1020
        %v1033 = vadd.f32 %v1005, %v1029
        %v1034 = vadd.f32 %v1006, %v1030
        %v1035 = vadd.f32 %v1007, %v1031
        %v1036 = vadd.f32 %v1008, %v1032
        %1041 = vrot.lane.b32.xlu0 %v1001, 127
        %v1042 = vpop.permute.xlu0 %1041
        %1043 = vrot.lane.b32.xlu0 %v1002, 127
        %v1044 = vpop.permute.xlu0 %1043
        %1045 = vrot.lane.b32.xlu0 %v1003, 127
        %v1046 = vpop.permute.xlu0 %1045
        %1047 = vrot.lane.b32.xlu0 %v1004, 127
        %v1048 = vpop.permute.xlu0 %1047
        %v1049 = vsel %vm1021, %v1042, %v1044
        %v1050 = vsel %vm1021, %v1044, %v1046
        %v1051 = vsel %vm1021, %v1046, %v1048
        %v1056 = vmul.f32 %v585, %v1049
        %v1057 = vmul.f32 %v586, %v1050
        %v1058 = vmul.f32 %v587, %v1051
        %v1059 = vmul.f32 %v588, %v1048
        %v1060 = vadd.f32 %v1033, %v1056
        %v1061 = vadd.f32 %v1034, %v1057
        %v1062 = vadd.f32 %v1035, %v1058
        %v1063 = vadd.f32 %v1036, %v1059
        %1068 = vrot.lane.b32.xlu0 %v1060, 109
        %v1069 = vpop.permute.xlu0 %1068
        %1070 = vrot.lane.b32.xlu0 %v1061, 109
        %v1071 = vpop.permute.xlu0 %1070
        %1072 = vrot.lane.b32.xlu0 %v1062, 109
        %v1073 = vpop.permute.xlu0 %1072
        %1074 = vrot.lane.b32.xlu0 %v1063, 109
        %v1075 = vpop.permute.xlu0 %1074
        %v1076 = vsel %vm658, %v1069, %v1071
        %v1077 = vsel %vm658, %v1071, %v1073
        %v1078 = vsel %vm658, %v1073, %v1075
        %1082 = vst [vmem:[#allocation3 + $0x78] sm:$0xff] %v1076
        %1083 = vst [vmem:[#allocation3 + $0x80] sm:$0xff] %v1077
        %1084 = vst [vmem:[#allocation3 + $0x88] sm:$0xff] %v1078
        %v1085 = vmax.f32 %v993, %v1060
        %v1086 = vmax.f32 %v994, %v1061
        %v1087 = vmax.f32 %v995, %v1062
        %v1088 = vmax.f32 %v996, %v1063
        %v1089 = vld [vmem:[#allocation2] sm:$0xff]
        %v1090 = vld [vmem:[#allocation2 + $0x8] sm:$0xff]
        %v1091 = vld [vmem:[#allocation2 + $0x10] sm:$0xff]
        %v1092 = vld [vmem:[#allocation2 + $0x18] sm:$0xff]
        %v1093 = vld [vmem:[#allocation2 + $0x20] sm:$0xff]
        %v1094 = vld [vmem:[#allocation2 + $0x28] sm:$0xff]
        %v1095 = vld [vmem:[#allocation2 + $0x30] sm:$0xff]
        %v1096 = vld [vmem:[#allocation2 + $0x38] sm:$0xff]
        %v1097 = vld [vmem:[#allocation2 + $0x180] sm:$0xff]
        %v1098 = vld [vmem:[#allocation2 + $0x188] sm:$0xff]
        %v1099 = vld [vmem:[#allocation2 + $0x190] sm:$0xff]
        %v1100 = vld [vmem:[#allocation2 + $0x198] sm:$0xff]
        %1105 = vrot.lane.b32.xlu0 %v1089, 111
        %v1106 = vpop.permute.xlu0 %1105
        %1107 = vrot.lane.b32.xlu0 %v1090, 111
        %v1108 = vpop.permute.xlu0 %1107
        %1109 = vrot.lane.b32.xlu0 %v1091, 111
        %v1110 = vpop.permute.xlu0 %1109
        %1111 = vrot.lane.b32.xlu0 %v1092, 111
        %v1112 = vpop.permute.xlu0 %1111
        %vm1113 = vcmask 908288
        %v1114 = vsel %vm1113, %v1106, %v1108
        %v1115 = vsel %vm1113, %v1108, %v1110
        %v1116 = vsel %vm1113, %v1110, %v1112
        %v1121 = vmul.f32 %v581, %v1114
        %v1122 = vmul.f32 %v582, %v1115
        %v1123 = vmul.f32 %v583, %v1116
        %v1124 = vmul.f32 %v584, %v1112
        %v1125 = vadd.f32 %v1097, %v1121
        %v1126 = vadd.f32 %v1098, %v1122
        %v1127 = vadd.f32 %v1099, %v1123
        %v1128 = vadd.f32 %v1100, %v1124
        %1133 = vrot.lane.b32.xlu0 %v1093, 111
        %v1134 = vpop.permute.xlu0 %1133
        %1135 = vrot.lane.b32.xlu0 %v1094, 111
        %v1136 = vpop.permute.xlu0 %1135
        %1137 = vrot.lane.b32.xlu0 %v1095, 111
        %v1138 = vpop.permute.xlu0 %1137
        %1139 = vrot.lane.b32.xlu0 %v1096, 111
        %v1140 = vpop.permute.xlu0 %1139
        %v1141 = vsel %vm1113, %v1134, %v1136
        %v1142 = vsel %vm1113, %v1136, %v1138
        %v1143 = vsel %vm1113, %v1138, %v1140
        %v1148 = vmul.f32 %v585, %v1141
        %v1149 = vmul.f32 %v586, %v1142
        %v1150 = vmul.f32 %v587, %v1143
        %v1151 = vmul.f32 %v588, %v1140
        %v1152 = vadd.f32 %v1125, %v1148
        %v1153 = vadd.f32 %v1126, %v1149
        %v1154 = vadd.f32 %v1127, %v1150
        %v1155 = vadd.f32 %v1128, %v1151
        %1160 = vrot.lane.b32.xlu0 %v1152, 109
        %v1161 = vpop.permute.xlu0 %1160
        %1162 = vrot.lane.b32.xlu0 %v1153, 109
        %v1163 = vpop.permute.xlu0 %1162
        %1164 = vrot.lane.b32.xlu0 %v1154, 109
        %v1165 = vpop.permute.xlu0 %1164
        %1166 = vrot.lane.b32.xlu0 %v1155, 109
        %v1167 = vpop.permute.xlu0 %1166
        %v1168 = vsel %vm658, %v1161, %v1163
        %v1169 = vsel %vm658, %v1163, %v1165
        %v1170 = vsel %vm658, %v1165, %v1167
        %1174 = vst [vmem:[#allocation3 + $0x90] sm:$0xff] %v1168
        %1175 = vst [vmem:[#allocation3 + $0x98] sm:$0xff] %v1169
        %1176 = vst [vmem:[#allocation3 + $0xa0] sm:$0xff] %v1170
        %v1177 = vmax.f32 %v1085, %v1152
        %v1178 = vmax.f32 %v1086, %v1153
        %v1179 = vmax.f32 %v1087, %v1154
        %v1180 = vmax.f32 %v1088, %v1155
        %v1181 = vld [vmem:[#allocation2] sm:$0xff]
        %v1182 = vld [vmem:[#allocation2 + $0x8] sm:$0xff]
        %v1183 = vld [vmem:[#allocation2 + $0x10] sm:$0xff]
        %v1184 = vld [vmem:[#allocation2 + $0x18] sm:$0xff]
        %v1185 = vld [vmem:[#allocation2 + $0x20] sm:$0xff]
        %v1186 = vld [vmem:[#allocation2 + $0x28] sm:$0xff]
        %v1187 = vld [vmem:[#allocation2 + $0x30] sm:$0xff]
        %v1188 = vld [vmem:[#allocation2 + $0x38] sm:$0xff]
        %v1189 = vld [vmem:[#allocation2 + $0x1a0] sm:$0xff]
        %v1190 = vld [vmem:[#allocation2 + $0x1a8] sm:$0xff]
        %v1191 = vld [vmem:[#allocation2 + $0x1b0] sm:$0xff]
        %v1192 = vld [vmem:[#allocation2 + $0x1b8] sm:$0xff]
        %1197 = vrot.lane.b32.xlu0 %v1181, 110
        %v1198 = vpop.permute.xlu0 %1197
        %1199 = vrot.lane.b32.xlu0 %v1182, 110
        %v1200 = vpop.permute.xlu0 %1199
        %1201 = vrot.lane.b32.xlu0 %v1183, 110
        %v1202 = vpop.permute.xlu0 %1201
        %1203 = vrot.lane.b32.xlu0 %v1184, 110
        %v1204 = vpop.permute.xlu0 %1203
        %vm1205 = vcmask 900096
        %v1206 = vsel %vm1205, %v1198, %v1200
        %v1207 = vsel %vm1205, %v1200, %v1202
        %v1208 = vsel %vm1205, %v1202, %v1204
        %v1213 = vmul.f32 %v581, %v1206
        %v1214 = vmul.f32 %v582, %v1207
        %v1215 = vmul.f32 %v583, %v1208
        %v1216 = vmul.f32 %v584, %v1204
        %v1217 = vadd.f32 %v1189, %v1213
        %v1218 = vadd.f32 %v1190, %v1214
        %v1219 = vadd.f32 %v1191, %v1215
        %v1220 = vadd.f32 %v1192, %v1216
        %1225 = vrot.lane.b32.xlu0 %v1185, 110
        %v1226 = vpop.permute.xlu0 %1225
        %1227 = vrot.lane.b32.xlu0 %v1186, 110
        %v1228 = vpop.permute.xlu0 %1227
        %1229 = vrot.lane.b32.xlu0 %v1187, 110
        %v1230 = vpop.permute.xlu0 %1229
        %1231 = vrot.lane.b32.xlu0 %v1188, 110
        %v1232 = vpop.permute.xlu0 %1231
        %v1233 = vsel %vm1205, %v1226, %v1228
        %v1234 = vsel %vm1205, %v1228, %v1230
        %v1235 = vsel %vm1205, %v1230, %v1232
        %v1240 = vmul.f32 %v585, %v1233
        %v1241 = vmul.f32 %v586, %v1234
        %v1242 = vmul.f32 %v587, %v1235
        %v1243 = vmul.f32 %v588, %v1232
        %v1244 = vadd.f32 %v1217, %v1240
        %v1245 = vadd.f32 %v1218, %v1241
        %v1246 = vadd.f32 %v1219, %v1242
        %v1247 = vadd.f32 %v1220, %v1243
        %1252 = vrot.lane.b32.xlu0 %v1244, 109
        %v1253 = vpop.permute.xlu0 %1252
        %1254 = vrot.lane.b32.xlu0 %v1245, 109
        %v1255 = vpop.permute.xlu0 %1254
        %1256 = vrot.lane.b32.xlu0 %v1246, 109
        %v1257 = vpop.permute.xlu0 %1256
        %1258 = vrot.lane.b32.xlu0 %v1247, 109
        %v1259 = vpop.permute.xlu0 %1258
        %v1260 = vsel %vm658, %v1253, %v1255
        %v1261 = vsel %vm658, %v1255, %v1257
        %v1262 = vsel %vm658, %v1257, %v1259
        %1266 = vst [vmem:[#allocation3 + $0xa8] sm:$0xff] %v1260
        %1267 = vst [vmem:[#allocation3 + $0xb0] sm:$0xff] %v1261
        %1268 = vst [vmem:[#allocation3 + $0xb8] sm:$0xff] %v1262
        %v1269 = vmax.f32 %v1177, %v1244
        %v1270 = vmax.f32 %v1178, %v1245
        %v1271 = vmax.f32 %v1179, %v1246
        %v1272 = vmax.f32 %v1180, %v1247
        %v1273 = vld [vmem:[#allocation2] sm:$0xff]
        %v1274 = vld [vmem:[#allocation2 + $0x8] sm:$0xff]
        %v1275 = vld [vmem:[#allocation2 + $0x10] sm:$0xff]
        %v1276 = vld [vmem:[#allocation2 + $0x18] sm:$0xff]
        %v1277 = vld [vmem:[#allocation2 + $0x20] sm:$0xff]
        %v1278 = vld [vmem:[#allocation2 + $0x28] sm:$0xff]
        %v1279 = vld [vmem:[#allocation2 + $0x30] sm:$0xff]
        %v1280 = vld [vmem:[#allocation2 + $0x38] sm:$0xff]
        %v1281 = vld [vmem:[#allocation2 + $0x1c0] sm:$0xff]
        %v1282 = vld [vmem:[#allocation2 + $0x1c8] sm:$0xff]
        %v1283 = vld [vmem:[#allocation2 + $0x1d0] sm:$0xff]
        %v1284 = vld [vmem:[#allocation2 + $0x1d8] sm:$0xff]
        %1289 = vrot.lane.b32.xlu0 %v1273, 109
        %v1290 = vpop.permute.xlu0 %1289
        %1291 = vrot.lane.b32.xlu0 %v1274, 109
        %v1292 = vpop.permute.xlu0 %1291
        %1293 = vrot.lane.b32.xlu0 %v1275, 109
        %v1294 = vpop.permute.xlu0 %1293
        %1295 = vrot.lane.b32.xlu0 %v1276, 109
        %v1296 = vpop.permute.xlu0 %1295
        %v1297 = vsel %vm658, %v1290, %v1292
        %v1298 = vsel %vm658, %v1292, %v1294
        %v1299 = vsel %vm658, %v1294, %v1296
        %v1304 = vmul.f32 %v581, %v1297
        %v1305 = vmul.f32 %v582, %v1298
        %v1306 = vmul.f32 %v583, %v1299
        %v1307 = vmul.f32 %v584, %v1296
        %v1308 = vadd.f32 %v1281, %v1304
        %v1309 = vadd.f32 %v1282, %v1305
        %v1310 = vadd.f32 %v1283, %v1306
        %v1311 = vadd.f32 %v1284, %v1307
        %1316 = vrot.lane.b32.xlu0 %v1277, 109
        %v1317 = vpop.permute.xlu0 %1316
        %1318 = vrot.lane.b32.xlu0 %v1278, 109
        %v1319 = vpop.permute.xlu0 %1318
        %1320 = vrot.lane.b32.xlu0 %v1279, 109
        %v1321 = vpop.permute.xlu0 %1320
        %1322 = vrot.lane.b32.xlu0 %v1280, 109
        %v1323 = vpop.permute.xlu0 %1322
        %v1324 = vsel %vm658, %v1317, %v1319
        %v1325 = vsel %vm658, %v1319, %v1321
        %v1326 = vsel %vm658, %v1321, %v1323
        %v1331 = vmul.f32 %v585, %v1324
        %v1332 = vmul.f32 %v586, %v1325
        %v1333 = vmul.f32 %v587, %v1326
        %v1334 = vmul.f32 %v588, %v1323
        %v1335 = vadd.f32 %v1308, %v1331
        %v1336 = vadd.f32 %v1309, %v1332
        %v1337 = vadd.f32 %v1310, %v1333
        %v1338 = vadd.f32 %v1311, %v1334
        %1343 = vrot.lane.b32.xlu0 %v1335, 109
        %v1344 = vpop.permute.xlu0 %1343
        %1345 = vrot.lane.b32.xlu0 %v1336, 109
        %v1346 = vpop.permute.xlu0 %1345
        %1347 = vrot.lane.b32.xlu0 %v1337, 109
        %v1348 = vpop.permute.xlu0 %1347
        %1349 = vrot.lane.b32.xlu0 %v1338, 109
        %v1350 = vpop.permute.xlu0 %1349
        %v1351 = vsel %vm658, %v1344, %v1346
        %v1352 = vsel %vm658, %v1346, %v1348
        %v1353 = vsel %vm658, %v1348, %v1350
        %1357 = vst [vmem:[#allocation3 + $0xc0] sm:$0xff] %v1351
        %1358 = vst [vmem:[#allocation3 + $0xc8] sm:$0xff] %v1352
        %1359 = vst [vmem:[#allocation3 + $0xd0] sm:$0xff] %v1353
        %v1360 = vmax.f32 %v1269, %v1335
        %v1361 = vmax.f32 %v1270, %v1336
        %v1362 = vmax.f32 %v1271, %v1337
        %v1363 = vmax.f32 %v1272, %v1338
        %v1364 = vld [vmem:[#allocation3] sm:$0xff]
        %v1365 = vld [vmem:[#allocation3 + $0x8] sm:$0xff]
        %v1366 = vld [vmem:[#allocation3 + $0x10] sm:$0xff]
        %1371 = vrot.lane.b32.xlu0 %v1360, 109
        %v1372 = vpop.permute.xlu0 %1371
        %1373 = vrot.lane.b32.xlu0 %v1361, 109
        %v1374 = vpop.permute.xlu0 %1373
        %1375 = vrot.lane.b32.xlu0 %v1362, 109
        %v1376 = vpop.permute.xlu0 %1375
        %1377 = vrot.lane.b32.xlu0 %v1363, 109
        %v1378 = vpop.permute.xlu0 %1377
        %v1379 = vsel %vm658, %v1372, %v1374
        %v1380 = vsel %vm658, %v1374, %v1376
        %v1381 = vsel %vm658, %v1376, %v1378
        %v1385 = vsub.f32 %v1364, %v1379
        %v1386 = vsub.f32 %v1365, %v1380
        %v1387 = vsub.f32 %v1366, %v1381
        %v1388 = vmul.f32 %v1385, 1.442695
        %v1389 = vpow.pop %v1388
        %v1390 = vmul.f32 %v1386, 1.442695
        %v1391 = vpow.pop %v1390
        %v1392 = vmul.f32 %v1387, 1.442695
        %v1393 = vpow.pop %v1392
        %v1394 = vadd.f32 %v1389, 0.0
        %v1395 = vadd.f32 %v1391, 0.0
        %v1396 = vadd.f32 %v1393, 0.0
        %v1397 = vld [vmem:[#allocation2 + $0x40] sm:$0xff]
        %v1398 = vld [vmem:[#allocation2 + $0x48] sm:$0xff]
        %v1399 = vld [vmem:[#allocation2 + $0x50] sm:$0xff]
        %v1400 = vld [vmem:[#allocation2 + $0x60] sm:$0xff]
        %v1401 = vld [vmem:[#allocation2 + $0x68] sm:$0xff]
        %v1402 = vld [vmem:[#allocation2 + $0x70] sm:$0xff]
        %v1403 = vmul.f32 %v1389, %v1397
        %v1404 = vmul.f32 %v1391, %v1398
        %v1405 = vmul.f32 %v1393, %v1399
        %v1406 = vadd.f32 %v1403, 0.0
        %v1407 = vadd.f32 %v1404, 0.0
        %v1408 = vadd.f32 %v1405, 0.0
        %v1409 = vmul.f32 %v1389, %v1400
        %v1410 = vmul.f32 %v1391, %v1401
        %v1411 = vmul.f32 %v1393, %v1402
        %v1412 = vadd.f32 %v1409, 0.0
        %v1413 = vadd.f32 %v1410, 0.0
        %v1414 = vadd.f32 %v1411, 0.0
        %v1415 = vld [vmem:[#allocation3 + $0x18] sm:$0xff]
        %v1416 = vld [vmem:[#allocation3 + $0x20] sm:$0xff]
        %v1417 = vld [vmem:[#allocation3 + $0x28] sm:$0xff]
        %v1418 = vsub.f32 %v1415, %v1379
        %v1419 = vsub.f32 %v1416, %v1380
        %v1420 = vsub.f32 %v1417, %v1381
        %v1421 = vmul.f32 %v1418, 1.442695
        %v1422 = vpow.pop %v1421
        %v1423 = vmul.f32 %v1419, 1.442695
        %v1424 = vpow.pop %v1423
        %v1425 = vmul.f32 %v1420, 1.442695
        %v1426 = vpow.pop %v1425
        %v1427 = vadd.f32 %v1394, %v1422
        %v1428 = vadd.f32 %v1395, %v1424
        %v1429 = vadd.f32 %v1396, %v1426
        %v1430 = vld [vmem:[#allocation2 + $0x58] sm:$0xff]
        %v1431 = vld [vmem:[#allocation2 + $0x78] sm:$0xff]
        %1436 = vrot.lane.b32.xlu0 %v1397, 127
        %v1437 = vpop.permute.xlu0 %1436
        %1438 = vrot.lane.b32.xlu0 %v1398, 127
        %v1439 = vpop.permute.xlu0 %1438
        %1440 = vrot.lane.b32.xlu0 %v1399, 127
        %v1441 = vpop.permute.xlu0 %1440
        %1442 = vrot.lane.b32.xlu0 %v1430, 127
        %v1443 = vpop.permute.xlu0 %1442
        %v1444 = vsel %vm1021, %v1437, %v1439
        %v1445 = vsel %vm1021, %v1439, %v1441
        %v1446 = vsel %vm1021, %v1441, %v1443
        %v1450 = vmul.f32 %v1422, %v1444
        %v1451 = vmul.f32 %v1424, %v1445
        %v1452 = vmul.f32 %v1426, %v1446
        %v1453 = vadd.f32 %v1406, %v1450
        %v1454 = vadd.f32 %v1407, %v1451
        %v1455 = vadd.f32 %v1408, %v1452
        %1460 = vrot.lane.b32.xlu0 %v1400, 127
        %v1461 = vpop.permute.xlu0 %1460
        %1462 = vrot.lane.b32.xlu0 %v1401, 127
        %v1463 = vpop.permute.xlu0 %1462
        %1464 = vrot.lane.b32.xlu0 %v1402, 127
        %v1465 = vpop.permute.xlu0 %1464
        %1466 = vrot.lane.b32.xlu0 %v1431, 127
        %v1467 = vpop.permute.xlu0 %1466
        %v1468 = vsel %vm1021, %v1461, %v1463
        %v1469 = vsel %vm1021, %v1463, %v1465
        %v1470 = vsel %vm1021, %v1465, %v1467
        %v1474 = vmul.f32 %v1422, %v1468
        %v1475 = vmul.f32 %v1424, %v1469
        %v1476 = vmul.f32 %v1426, %v1470
        %v1477 = vadd.f32 %v1412, %v1474
        %v1478 = vadd.f32 %v1413, %v1475
        %v1479 = vadd.f32 %v1414, %v1476
        %v1480 = vld [vmem:[#allocation3 + $0x30] sm:$0xff]
        %v1481 = vld [vmem:[#allocation3 + $0x38] sm:$0xff]
        %v1482 = vld [vmem:[#allocation3 + $0x40] sm:$0xff]
        %v1483 = vsub.f32 %v1480, %v1379
        %v1484 = vsub.f32 %v1481, %v1380
        %v1485 = vsub.f32 %v1482, %v1381
        %v1486 = vmul.f32 %v1483, 1.442695
        %v1487 = vpow.pop %v1486
        %v1488 = vmul.f32 %v1484, 1.442695
        %v1489 = vpow.pop %v1488
        %v1490 = vmul.f32 %v1485, 1.442695
        %v1491 = vpow.pop %v1490
        %v1492 = vadd.f32 %v1427, %v1487
        %v1493 = vadd.f32 %v1428, %v1489
        %v1494 = vadd.f32 %v1429, %v1491
        %1495 = vrot.lane.b32.xlu0 %v1397, 126
        %v1496 = vpop.permute.xlu0 %1495
        %1497 = vrot.lane.b32.xlu0 %v1398, 126
        %v1498 = vpop.permute.xlu0 %1497
        %1499 = vrot.lane.b32.xlu0 %v1399, 126
        %v1500 = vpop.permute.xlu0 %1499
        %1501 = vrot.lane.b32.xlu0 %v1430, 126
        %v1502 = vpop.permute.xlu0 %1501
        %vm1503 = vcmask 1031168
        %v1504 = vsel %vm1503, %v1496, %v1498
        %v1505 = vsel %vm1503, %v1498, %v1500
        %v1506 = vsel %vm1503, %v1500, %v1502
        %v1510 = vmul.f32 %v1487, %v1504
        %v1511 = vmul.f32 %v1489, %v1505
        %v1512 = vmul.f32 %v1491, %v1506
        %v1513 = vadd.f32 %v1453, %v1510
        %v1514 = vadd.f32 %v1454, %v1511
        %v1515 = vadd.f32 %v1455, %v1512
        %1516 = vrot.lane.b32.xlu0 %v1400, 126
        %v1517 = vpop.permute.xlu0 %1516
        %1518 = vrot.lane.b32.xlu0 %v1401, 126
        %v1519 = vpop.permute.xlu0 %1518
        %1520 = vrot.lane.b32.xlu0 %v1402, 126
        %v1521 = vpop.permute.xlu0 %1520
        %1522 = vrot.lane.b32.xlu0 %v1431, 126
        %v1523 = vpop.permute.xlu0 %1522
        %v1524 = vsel %vm1503, %v1517, %v1519
        %v1525 = vsel %vm1503, %v1519, %v1521
        %v1526 = vsel %vm1503, %v1521, %v1523
        %v1530 = vmul.f32 %v1487, %v1524
        %v1531 = vmul.f32 %v1489, %v1525
        %v1532 = vmul.f32 %v1491, %v1526
        %v1533 = vadd.f32 %v1477, %v1530
        %v1534 = vadd.f32 %v1478, %v1531
        %v1535 = vadd.f32 %v1479, %v1532
        %v1536 = vld [vmem:[#allocation3 + $0x48] sm:$0xff]
        %v1537 = vld [vmem:[#allocation3 + $0x50] sm:$0xff]
        %v1538 = vld [vmem:[#allocation3 + $0x58] sm:$0xff]
        %v1539 = vsub.f32 %v1536, %v1379
        %v1540 = vsub.f32 %v1537, %v1380
        %v1541 = vsub.f32 %v1538, %v1381
        %v1542 = vmul.f32 %v1539, 1.442695
        %v1543 = vpow.pop %v1542
        %v1544 = vmul.f32 %v1540, 1.442695
        %v1545 = vpow.pop %v1544
        %v1546 = vmul.f32 %v1541, 1.442695
        %v1547 = vpow.pop %v1546
        %v1548 = vadd.f32 %v1492, %v1543
        %v1549 = vadd.f32 %v1493, %v1545
        %v1550 = vadd.f32 %v1494, %v1547
        %1551 = vrot.lane.b32.xlu0 %v1397, 110
        %v1552 = vpop.permute.xlu0 %1551
        %1553 = vrot.lane.b32.xlu0 %v1398, 110
        %v1554 = vpop.permute.xlu0 %1553
        %1555 = vrot.lane.b32.xlu0 %v1399, 110
        %v1556 = vpop.permute.xlu0 %1555
        %1557 = vrot.lane.b32.xlu0 %v1430, 110
        %v1558 = vpop.permute.xlu0 %1557
        %v1559 = vsel %vm1205, %v1552, %v1554
        %v1560 = vsel %vm1205, %v1554, %v1556
        %v1561 = vsel %vm1205, %v1556, %v1558
        %v1565 = vmul.f32 %v1543, %v1559
        %v1566 = vmul.f32 %v1545, %v1560
        %v1567 = vmul.f32 %v1547, %v1561
        %v1568 = vadd.f32 %v1513, %v1565
        %v1569 = vadd.f32 %v1514, %v1566
        %v1570 = vadd.f32 %v1515, %v1567
        %1571 = vrot.lane.b32.xlu0 %v1400, 110
        %v1572 = vpop.permute.xlu0 %1571
        %1573 = vrot.lane.b32.xlu0 %v1401, 110
        %v1574 = vpop.permute.xlu0 %1573
        %1575 = vrot.lane.b32.xlu0 %v1402, 110
        %v1576 = vpop.permute.xlu0 %1575
        %1577 = vrot.lane.b32.xlu0 %v1431, 110
        %v1578 = vpop.permute.xlu0 %1577
        %v1579 = vsel %vm1205, %v1572, %v1574
        %v1580 = vsel %vm1205, %v1574, %v1576
        %v1581 = vsel %vm1205, %v1576, %v1578
        %v1585 = vmul.f32 %v1543, %v1579
        %v1586 = vmul.f32 %v1545, %v1580
        %v1587 = vmul.f32 %v1547, %v1581
        %v1588 = vadd.f32 %v1533, %v1585
        %v1589 = vadd.f32 %v1534, %v1586
        %v1590 = vadd.f32 %v1535, %v1587
        %v1591 = vld [vmem:[#allocation3 + $0x60] sm:$0xff]
        %v1592 = vld [vmem:[#allocation3 + $0x68] sm:$0xff]
        %v1593 = vld [vmem:[#allocation3 + $0x70] sm:$0xff]
        %v1594 = vsub.f32 %v1591, %v1379
        %v1595 = vsub.f32 %v1592, %v1380
        %v1596 = vsub.f32 %v1593, %v1381
        %v1597 = vmul.f32 %v1594, 1.442695
        %v1598 = vpow.pop %v1597
        %v1599 = vmul.f32 %v1595, 1.442695
        %v1600 = vpow.pop %v1599
        %v1601 = vmul.f32 %v1596, 1.442695
        %v1602 = vpow.pop %v1601
        %v1603 = vadd.f32 %v1548, %v1598
        %v1604 = vadd.f32 %v1549, %v1600
        %v1605 = vadd.f32 %v1550, %v1602
        %1606 = vrot.lane.b32.xlu0 %v1397, 109
        %v1607 = vpop.permute.xlu0 %1606
        %1608 = vrot.lane.b32.xlu0 %v1398, 109
        %v1609 = vpop.permute.xlu0 %1608
        %1610 = vrot.lane.b32.xlu0 %v1399, 109
        %v1611 = vpop.permute.xlu0 %1610
        %1612 = vrot.lane.b32.xlu0 %v1430, 109
        %v1613 = vpop.permute.xlu0 %1612
        %v1614 = vsel %vm658, %v1607, %v1609
        %v1615 = vsel %vm658, %v1609, %v1611
        %v1616 = vsel %vm658, %v1611, %v1613
        %v1620 = vmul.f32 %v1598, %v1614
        %v1621 = vmul.f32 %v1600, %v1615
        %v1622 = vmul.f32 %v1602, %v1616
        %v1623 = vadd.f32 %v1568, %v1620
        %v1624 = vadd.f32 %v1569, %v1621
        %v1625 = vadd.f32 %v1570, %v1622
        %1626 = vrot.lane.b32.xlu0 %v1400, 109
        %v1627 = vpop.permute.xlu0 %1626
        %1628 = vrot.lane.b32.xlu0 %v1401, 109
        %v1629 = vpop.permute.xlu0 %1628
        %1630 = vrot.lane.b32.xlu0 %v1402, 109
        %v1631 = vpop.permute.xlu0 %1630
        %1632 = vrot.lane.b32.xlu0 %v1431, 109
        %v1633 = vpop.permute.xlu0 %1632
        %v1634 = vsel %vm658, %v1627, %v1629
        %v1635 = vsel %vm658, %v1629, %v1631
        %v1636 = vsel %vm658, %v1631, %v1633
        %v1640 = vmul.f32 %v1598, %v1634
        %v1641 = vmul.f32 %v1600, %v1635
        %v1642 = vmul.f32 %v1602, %v1636
        %v1643 = vadd.f32 %v1588, %v1640
        %v1644 = vadd.f32 %v1589, %v1641
        %v1645 = vadd.f32 %v1590, %v1642
        %v1646 = vld [vmem:[#allocation3 + $0x78] sm:$0xff]
        %v1647 = vld [vmem:[#allocation3 + $0x80] sm:$0xff]
        %v1648 = vld [vmem:[#allocation3 + $0x88] sm:$0xff]
        %v1649 = vsub.f32 %v1646, %v1379
        %v1650 = vsub.f32 %v1647, %v1380
        %v1651 = vsub.f32 %v1648, %v1381
        %v1652 = vmul.f32 %v1649, 1.442695
        %v1653 = vpow.pop %v1652
        %v1654 = vmul.f32 %v1650, 1.442695
        %v1655 = vpow.pop %v1654
        %v1656 = vmul.f32 %v1651, 1.442695
        %v1657 = vpow.pop %v1656
        %v1658 = vadd.f32 %v1603, %v1653
        %v1659 = vadd.f32 %v1604, %v1655
        %v1660 = vadd.f32 %v1605, %v1657
        %1661 = vrot.lane.b32.xlu0 %v1397, 108
        %v1662 = vpop.permute.xlu0 %1661
        %1663 = vrot.lane.b32.xlu0 %v1398, 108
        %v1664 = vpop.permute.xlu0 %1663
        %1665 = vrot.lane.b32.xlu0 %v1399, 108
        %v1666 = vpop.permute.xlu0 %1665
        %1667 = vrot.lane.b32.xlu0 %v1430, 108
        %v1668 = vpop.permute.xlu0 %1667
        %vm1669 = vcmask 883712
        %v1670 = vsel %vm1669, %v1662, %v1664
        %v1671 = vsel %vm1669, %v1664, %v1666
        %v1672 = vsel %vm1669, %v1666, %v1668
        %v1676 = vmul.f32 %v1653, %v1670
        %v1677 = vmul.f32 %v1655, %v1671
        %v1678 = vmul.f32 %v1657, %v1672
        %v1679 = vadd.f32 %v1623, %v1676
        %v1680 = vadd.f32 %v1624, %v1677
        %v1681 = vadd.f32 %v1625, %v1678
        %1682 = vrot.lane.b32.xlu0 %v1400, 108
        %v1683 = vpop.permute.xlu0 %1682
        %1684 = vrot.lane.b32.xlu0 %v1401, 108
        %v1685 = vpop.permute.xlu0 %1684
        %1686 = vrot.lane.b32.xlu0 %v1402, 108
        %v1687 = vpop.permute.xlu0 %1686
        %1688 = vrot.lane.b32.xlu0 %v1431, 108
        %v1689 = vpop.permute.xlu0 %1688
        %v1690 = vsel %vm1669, %v1683, %v1685
        %v1691 = vsel %vm1669, %v1685, %v1687
        %v1692 = vsel %vm1669, %v1687, %v1689
        %v1696 = vmul.f32 %v1653, %v1690
        %v1697 = vmul.f32 %v1655, %v1691
        %v1698 = vmul.f32 %v1657, %v1692
        %v1699 = vadd.f32 %v1643, %v1696
        %v1700 = vadd.f32 %v1644, %v1697
        %v1701 = vadd.f32 %v1645, %v1698
        %v1702 = vld [vmem:[#allocation3 + $0x90] sm:$0xff]
        %v1703 = vld [vmem:[#allocation3 + $0x98] sm:$0xff]
        %v1704 = vld [vmem:[#allocation3 + $0xa0] sm:$0xff]
        %v1705 = vsub.f32 %v1702, %v1379
        %v1706 = vsub.f32 %v1703, %v1380
        %v1707 = vsub.f32 %v1704, %v1381
        %v1708 = vmul.f32 %v1705, 1.442695
        %v1709 = vpow.pop %v1708
        %v1710 = vmul.f32 %v1706, 1.442695
        %v1711 = vpow.pop %v1710
        %v1712 = vmul.f32 %v1707, 1.442695
        %v1713 = vpow.pop %v1712
        %v1714 = vadd.f32 %v1658, %v1709
        %v1715 = vadd.f32 %v1659, %v1711
        %v1716 = vadd.f32 %v1660, %v1713
        %1717 = vrot.lane.b32.xlu0 %v1397, 92
        %v1718 = vpop.permute.xlu0 %1717
        %1719 = vrot.lane.b32.xlu0 %v1398, 92
        %v1720 = vpop.permute.xlu0 %1719
        %1721 = vrot.lane.b32.xlu0 %v1399, 92
        %v1722 = vpop.permute.xlu0 %1721
        %1723 = vrot.lane.b32.xlu0 %v1430, 92
        %v1724 = vpop.permute.xlu0 %1723
        %vm1725 = vcmask 752640
        %v1726 = vsel %vm1725, %v1718, %v1720
        %v1727 = vsel %vm1725, %v1720, %v1722
        %v1728 = vsel %vm1725, %v1722, %v1724
        %v1732 = vmul.f32 %v1709, %v1726
        %v1733 = vmul.f32 %v1711, %v1727
        %v1734 = vmul.f32 %v1713, %v1728
        %v1735 = vadd.f32 %v1679, %v1732
        %v1736 = vadd.f32 %v1680, %v1733
        %v1737 = vadd.f32 %v1681, %v1734
        %1738 = vrot.lane.b32.xlu0 %v1400, 92
        %v1739 = vpop.permute.xlu0 %1738
        %1740 = vrot.lane.b32.xlu0 %v1401, 92
        %v1741 = vpop.permute.xlu0 %1740
        %1742 = vrot.lane.b32.xlu0 %v1402, 92
        %v1743 = vpop.permute.xlu0 %1742
        %1744 = vrot.lane.b32.xlu0 %v1431, 92
        %v1745 = vpop.permute.xlu0 %1744
        %v1746 = vsel %vm1725, %v1739, %v1741
        %v1747 = vsel %vm1725, %v1741, %v1743
        %v1748 = vsel %vm1725, %v1743, %v1745
        %v1752 = vmul.f32 %v1709, %v1746
        %v1753 = vmul.f32 %v1711, %v1747
        %v1754 = vmul.f32 %v1713, %v1748
        %v1755 = vadd.f32 %v1699, %v1752
        %v1756 = vadd.f32 %v1700, %v1753
        %v1757 = vadd.f32 %v1701, %v1754
        %v1758 = vld [vmem:[#allocation3 + $0xa8] sm:$0xff]
        %v1759 = vld [vmem:[#allocation3 + $0xb0] sm:$0xff]
        %v1760 = vld [vmem:[#allocation3 + $0xb8] sm:$0xff]
        %v1761 = vsub.f32 %v1758, %v1379
        %v1762 = vsub.f32 %v1759, %v1380
        %v1763 = vsub.f32 %v1760, %v1381
        %v1764 = vmul.f32 %v1761, 1.442695
        %v1765 = vpow.pop %v1764
        %v1766 = vmul.f32 %v1762, 1.442695
        %v1767 = vpow.pop %v1766
        %v1768 = vmul.f32 %v1763, 1.442695
        %v1769 = vpow.pop %v1768
        %v1770 = vadd.f32 %v1714, %v1765
        %v1771 = vadd.f32 %v1715, %v1767
        %v1772 = vadd.f32 %v1716, %v1769
        %1773 = vrot.lane.b32.xlu0 %v1397, 91
        %v1774 = vpop.permute.xlu0 %1773
        %1775 = vrot.lane.b32.xlu0 %v1398, 91
        %v1776 = vpop.permute.xlu0 %1775
        %1777 = vrot.lane.b32.xlu0 %v1399, 91
        %v1778 = vpop.permute.xlu0 %1777
        %1779 = vrot.lane.b32.xlu0 %v1430, 91
        %v1780 = vpop.permute.xlu0 %1779
        %vm1781 = vcmask 744448
        %v1782 = vsel %vm1781, %v1774, %v1776
        %v1783 = vsel %vm1781, %v1776, %v1778
        %v1784 = vsel %vm1781, %v1778, %v1780
        %v1788 = vmul.f32 %v1765, %v1782
        %v1789 = vmul.f32 %v1767, %v1783
        %v1790 = vmul.f32 %v1769, %v1784
        %v1791 = vadd.f32 %v1735, %v1788
        %v1792 = vadd.f32 %v1736, %v1789
        %v1793 = vadd.f32 %v1737, %v1790
        %1794 = vrot.lane.b32.xlu0 %v1400, 91
        %v1795 = vpop.permute.xlu0 %1794
        %1796 = vrot.lane.b32.xlu0 %v1401, 91
        %v1797 = vpop.permute.xlu0 %1796
        %1798 = vrot.lane.b32.xlu0 %v1402, 91
        %v1799 = vpop.permute.xlu0 %1798
        %1800 = vrot.lane.b32.xlu0 %v1431, 91
        %v1801 = vpop.permute.xlu0 %1800
        %v1802 = vsel %vm1781, %v1795, %v1797
        %v1803 = vsel %vm1781, %v1797, %v1799
        %v1804 = vsel %vm1781, %v1799, %v1801
        %v1808 = vmul.f32 %v1765, %v1802
        %v1809 = vmul.f32 %v1767, %v1803
        %v1810 = vmul.f32 %v1769, %v1804
        %v1811 = vadd.f32 %v1755, %v1808
        %v1812 = vadd.f32 %v1756, %v1809
        %v1813 = vadd.f32 %v1757, %v1810
        %v1814 = vld [vmem:[#allocation3 + $0xc0] sm:$0xff]
        %v1815 = vld [vmem:[#allocation3 + $0xc8] sm:$0xff]
        %v1816 = vld [vmem:[#allocation3 + $0xd0] sm:$0xff]
        %v1817 = vsub.f32 %v1814, %v1379
        %v1818 = vsub.f32 %v1815, %v1380
        %v1819 = vsub.f32 %v1816, %v1381
        %v1820 = vmul.f32 %v1817, 1.442695
        %v1821 = vpow.pop %v1820
        %v1822 = vmul.f32 %v1818, 1.442695
        %v1823 = vpow.pop %v1822
        %v1824 = vmul.f32 %v1819, 1.442695
        %v1825 = vpow.pop %v1824
        %v1826 = vadd.f32 %v1770, %v1821
        %v1827 = vadd.f32 %v1771, %v1823
        %v1828 = vadd.f32 %v1772, %v1825
        %1829 = vrot.lane.b32.xlu0 %v1397, 90
        %v1830 = vpop.permute.xlu0 %1829
        %1831 = vrot.lane.b32.xlu0 %v1398, 90
        %v1832 = vpop.permute.xlu0 %1831
        %1833 = vrot.lane.b32.xlu0 %v1399, 90
        %v1834 = vpop.permute.xlu0 %1833
        %1835 = vrot.lane.b32.xlu0 %v1430, 90
        %v1836 = vpop.permute.xlu0 %1835
        %vm1837 = vcmask 736256
        %v1838 = vsel %vm1837, %v1830, %v1832
        %v1839 = vsel %vm1837, %v1832, %v1834
        %v1840 = vsel %vm1837, %v1834, %v1836
        %v1844 = vmul.f32 %v1821, %v1838
        %v1845 = vmul.f32 %v1823, %v1839
        %v1846 = vmul.f32 %v1825, %v1840
        %v1847 = vadd.f32 %v1791, %v1844
        %v1848 = vadd.f32 %v1792, %v1845
        %v1849 = vadd.f32 %v1793, %v1846
        %1850 = vrot.lane.b32.xlu0 %v1400, 90
        %v1851 = vpop.permute.xlu0 %1850
        %1852 = vrot.lane.b32.xlu0 %v1401, 90
        %v1853 = vpop.permute.xlu0 %1852
        %1854 = vrot.lane.b32.xlu0 %v1402, 90
        %v1855 = vpop.permute.xlu0 %1854
        %1856 = vrot.lane.b32.xlu0 %v1431, 90
        %v1857 = vpop.permute.xlu0 %1856
        %v1858 = vsel %vm1837, %v1851, %v1853
        %v1859 = vsel %vm1837, %v1853, %v1855
        %v1860 = vsel %vm1837, %v1855, %v1857
        %v1864 = vmul.f32 %v1821, %v1858
        %v1865 = vmul.f32 %v1823, %v1859
        %v1866 = vmul.f32 %v1825, %v1860
        %v1867 = vadd.f32 %v1811, %v1864
        %v1868 = vadd.f32 %v1812, %v1865
        %v1869 = vadd.f32 %v1813, %v1866
        %v1870 = vrcp.pop %v1826
        %v1871 = vrcp.pop %v1827
        %v1872 = vrcp.pop %v1828
        %v1873 = vmul.f32 %v1847, %v1870
        %v1874 = vmul.f32 %v1848, %v1871
        %v1875 = vmul.f32 %v1849, %v1872
        %1876 = vst [vmem:[%s136] sm:$0xff] %v1873
        %1877 = vst [vmem:[%s136 + $0x8] sm:$0xff] %v1874
        %1878 = vst [vmem:[%s136 + $0x10] sm:$0xff] %v1875
        %v1879 = vmul.f32 %v1867, %v1870
        %v1880 = vmul.f32 %v1868, %v1871
        %v1881 = vmul.f32 %v1869, %v1872
        %1882 = vst [vmem:[%s136 + $0x18] sm:$0xff] %v1879
        %1883 = vst [vmem:[%s136 + $0x20] sm:$0xff] %v1880
        %1884 = vst [vmem:[%s136 + $0x28] sm:$0xff] %v1881
        %s1885 = sand.u32 %s71, 1
        %s1886 = scalar_lea.sflag [#allocation5], %s1885
        %s1887 = sand.u32 %s71, 1
        %s1888 = smul.addr %s1887, 48
        %s1889 = scalar_lea.vmem [#allocation4], %s1888
        // Predicated region
        $region29: #{tpu_custom_call.1} parent=27 // pred_check
          %p1890 = pneg %p81
        $region30: #{tpu_custom_call.1} parent=27 // pred_check_branch
          %1892 = sbr.rel (%p1890) target = $region32
        $region31: #{tpu_custom_call.1} parent=27 // pred_region
          %s1894 = ssub.s32 768, 768
          %1895 = vsyncadd %s1886, %s1894
          %s1896 = smul.addr %s16, 6
          %s1897 = smul.addr %s1896, 128
          %s1898 = scalar_lea.hbm %s2, %s1897
          %s1899 = sshll.u32 %s1889, 4
          %s1900 = int_to_ptr.vmem [resolvable:$true] %s1899
          %1905 = dma.vmem_to_hbm [thread:$0]  %s1900, 768, %s1898, %s1886, 384, 384, 24
        $region32: #{tpu_custom_call.1} parent=27 // pred_fallthru
          _
      $region28: #{tpu_custom_call.1} parent=5 // pred_fallthru
        _
      %p1906 = scmp.le.s32.totalorder 2, %s11
      // Predicated region
      $region33: #{tpu_custom_call.1} parent=5 // pred_check
        %p1907 = pneg %p1906
      $region34: #{tpu_custom_call.1} parent=5 // pred_check_branch
        %1909 = sbr.rel (%p1907) target = $region36
      $region35: #{tpu_custom_call.1} parent=5 // pred_region
        %s1910 = ssub.s32 %s11, 2
        // Predicated region
        $region37: #{tpu_custom_call.1} parent=35 // pred_check
          %p1911 = pneg %p87
        $region38: #{tpu_custom_call.1} parent=35 // pred_check_branch
          %1913 = sbr.rel (%p1911) target = $region40
        $region39: #{tpu_custom_call.1} parent=35 // pred_region
          %s1914 = sand.u32 %s72, 1
          %s1915 = scalar_lea.sflag [#allocation5], %s1914
          %s1916 = sand.u32 %s72, 1
          %s1917 = smul.addr %s1916, 48
          %s1918 = scalar_lea.vmem [#allocation4], %s1917
          %1919 = dma.done %s1915, 768
        $region40: #{tpu_custom_call.1} parent=35 // pred_fallthru
          _
      $region36: #{tpu_custom_call.1} parent=5 // pred_fallthru
        _
    $region6: #{tpu_custom_call.1} parent=1 // loop_footer
      %s15 = sadd.s32 1, %s11
    $region7: #{tpu_custom_call.1} parent=1 // loop_footer_branch
      %10 = sbr.rel target = $region3
    $region8: #{tpu_custom_call.1} parent=1 // loop_exit
      _
    %1920 = vsyncpa [#allocation5], 1
    %s1921 = scalar_lea.sflag [#allocation5], 1
    %1922 = vsyncpa %s1921, 1

</llo_original>
